<compile_context>
chip_gen: v7x
topology: tpu7x:2x2x1
jax: 0.10.0
libtpu: 0.0.40
codegen_flags: <defaults>
</compile_context>

<pallas_src>
import math

import jax
import jax.numpy as jnp
from jax import lax
from jax.experimental import pallas as pl
from jax.experimental.pallas import tpu as pltpu

# ---- model config (small, consistent with a GQA Llama-style attention) ----
HIDDEN = 32
NUM_HEADS = 4
HEAD_DIM = HIDDEN // NUM_HEADS          # 8
NUM_KV_HEADS = 2
FACTOR = NUM_HEADS // NUM_KV_HEADS      # == k_proj.in_features // k_proj.out_features
BSZ = 2
Q_LEN = 8
PREFIX_LEN = 8                          # adaption prompt length


# ---------------------------------------------------------------------------
# Pallas kernel: fused adapter path for one batch element
# ---------------------------------------------------------------------------
def _make_fused_adapter_kernel(num_heads, num_kv_heads, head_dim):
    factor = num_heads // num_kv_heads
    inv_sqrt_d = 1.0 / math.sqrt(head_dim)

    def kernel(gate_ref, base_ref, q_ref, ak_ref, av_ref, kw_ref, vw_ref, ow_ref, o_ref):
        f32 = jnp.float32
        gate = gate_ref[0]                                   # scalar from SMEM

        ak = ak_ref[0].astype(f32)                           # (P, H)
        av = av_ref[0].astype(f32)                           # (P, H)

        # Adapter K/V projections, one (P, D) tile per *KV* head (GQA: no repeated KV is
        # ever materialized).  Slicing the weight ref along its sublane axis (multiples
        # of head_dim=8) keeps everything reshape/transpose free.
        k_heads = []
        v_heads = []
        for g in range(num_kv_heads):
            kw_g = kw_ref[g * head_dim:(g + 1) * head_dim, :].astype(f32)   # (D, H)
            vw_g = vw_ref[g * head_dim:(g + 1) * head_dim, :].astype(f32)   # (D, H)
            k_heads.append(lax.dot_general(ak, kw_g, (((1,), (1,)), ((), ())),
                                           preferred_element_type=f32))     # (P, D)
            v_heads.append(lax.dot_general(av, vw_g, (((1,), (1,)), ((), ())),
                                           preferred_element_type=f32))     # (P, D)

        # Start from the wrapped base-attention output (residual add fused in).
        acc = base_ref[0].astype(f32)                        # (Q, H)

        for h in range(num_heads):
            g = h // factor                                  # query head -> KV head
            q_h = q_ref[0, h].astype(f32)                    # (Q, D)
            k_g = k_heads[g]
            v_g = v_heads[g]

            # scores = q @ k^T / sqrt(d): contraction over last dims, no transpose.
            s = lax.dot_general(q_h, k_g, (((1,), (1,)), ((), ())),
                                preferred_element_type=f32) * inv_sqrt_d    # (Q, P)

            # fp32 softmax; fold adaption_gate into the EUP reciprocal of the denom.
            m = jnp.max(s, axis=-1, keepdims=True)
            p = jnp.exp(s - m)
            denom = jnp.sum(p, axis=-1, keepdims=True)
            p = p * (gate * pl.reciprocal(denom, approx=True))              # (Q, P)

            ctx_h = jnp.dot(p, v_g, preferred_element_type=f32)             # (Q, D)

            # Fused o_proj: ctx_h @ o_proj[:, h*D:(h+1)*D]^T, accumulated per head.
            ow_h = ow_ref[:, h * head_dim:(h + 1) * head_dim].astype(f32)   # (H, D)
            acc = acc + lax.dot_general(ctx_h, ow_h, (((1,), (1,)), ((), ())),
                                        preferred_element_type=f32)         # (Q, H)

        o_ref[0] = acc.astype(o_ref.dtype)                   # lane-dense (Q, H) store

    return kernel


def fused_adapter_attention_pallas(base_output, query_states, adapter_states_k,
                                   adapter_states_v, k_proj_w, v_proj_w, o_proj_w,
                                   adaption_gate):
    """Returns base_output + o_proj(adapter cross-attention), fused in one kernel.

    base_output:        (B, Q, H)      output of the wrapped LlamaAttention
    query_states:       (B, NH, Q, D)
    adapter_states_k/v: (B, P, H)
    k/v_proj_w:         (NUM_KV*D, H)  nn.Linear weights (out_features, in_features)
    o_proj_w:           (H, H)
    adaption_gate:      (1,)
    """
    bsz, q_len, hidden = base_output.shape
    _, num_heads, _, head_dim = query_states.shape
    prefix_len = adapter_states_k.shape[1]
    kv_out = k_proj_w.shape[0]
    num_kv_heads = kv_out // head_dim

    kernel = _make_fused_adapter_kernel(num_heads, num_kv_heads, head_dim)

    return pl.pallas_call(
        kernel,
        out_shape=jax.ShapeDtypeStruct((bsz, q_len, hidden), base_output.dtype),
        grid=(bsz,),
        in_specs=[
            pl.BlockSpec(memory_space=pltpu.MemorySpace.SMEM),                 # gate
            pl.BlockSpec((1, q_len, hidden), lambda b: (b, 0, 0)),             # base output
            pl.BlockSpec((1, num_heads, q_len, head_dim), lambda b: (b, 0, 0, 0)),
            pl.BlockSpec((1, prefix_len, hidden), lambda b: (b, 0, 0)),        # adapter K states
            pl.BlockSpec((1, prefix_len, hidden), lambda b: (b, 0, 0)),        # adapter V states
            pl.BlockSpec((kv_out, hidden), lambda b: (0, 0)),                  # k_proj weight
            pl.BlockSpec((kv_out, hidden), lambda b: (0, 0)),                  # v_proj weight
            pl.BlockSpec((hidden, hidden), lambda b: (0, 0)),                  # o_proj weight
        ],
        out_specs=pl.BlockSpec((1, q_len, hidden), lambda b: (b, 0, 0)),
        input_output_aliases={1: 0},      # write result back into the base-output buffer
        compiler_params=pltpu.CompilerParams(
            dimension_semantics=("parallel",)),    # v7x: one batch per TensorCore
    )(adaption_gate, base_output, query_states, adapter_states_k, adapter_states_v,
      k_proj_w, v_proj_w, o_proj_w)


# ---------------------------------------------------------------------------
# Plain-JAX glue: the wrapped base attention module (self.model(**kwargs))
# ---------------------------------------------------------------------------
def base_llama_attention(hidden_states, params):
    B, S, _ = hidden_states.shape
    q = hidden_states @ params["q_proj"].T                       # (B, S, H)
    k = hidden_states @ params["k_proj"].T                       # (B, S, KV*D)
    v = hidden_states @ params["v_proj"].T
    q = q.reshape(B, S, NUM_HEADS, HEAD_DIM).transpose(0, 2, 1, 3)
    k = k.reshape(B, S, NUM_KV_HEADS, HEAD_DIM).transpose(0, 2, 1, 3)
    v = v.reshape(B, S, NUM_KV_HEADS, HEAD_DIM).transpose(0, 2, 1, 3)
    k = jnp.repeat(k, FACTOR, axis=1)
    v = jnp.repeat(v, FACTOR, axis=1)
    scores = jnp.einsum("bhqd,bhkd->bhqk", q, k) / math.sqrt(HEAD_DIM)
    mask = jnp.tril(jnp.ones((S, S), dtype=bool))
    scores = jnp.where(mask, scores, -jnp.inf)
    probs = jax.nn.softmax(scores, axis=-1)
    ctx = jnp.einsum("bhqk,bhkd->bhqd", probs, v)
    ctx = ctx.transpose(0, 2, 1, 3).reshape(B, S, NUM_HEADS * HEAD_DIM)
    out = ctx @ params["o_proj"].T
    past_key_value = (k, v)
    return out, None, past_key_value


def compute_query_states(hidden_states, params):
    # TODO(synk): peft's real compute_query_states also applies rotary position embeddings.
    B, S, _ = hidden_states.shape
    q = hidden_states @ params["q_proj"].T
    return q.reshape(B, S, NUM_HEADS, HEAD_DIM).transpose(0, 2, 1, 3)


# ---------------------------------------------------------------------------
# AdaptedAttention.forward equivalent
# ---------------------------------------------------------------------------
def adapted_attention_forward(hidden_states, adapter_states, adaption_gate, params):
    # wrapped base attention (self.model(**kwargs))
    output, _, past_key_value = base_llama_attention(hidden_states, params)
    query_states = compute_query_states(hidden_states, params)   # (B, NH, Q, D)

    # --- fused Pallas adapter path (projections + attention + o_proj + residual) ---
    output = fused_adapter_attention_pallas(
        output, query_states, adapter_states[0], adapter_states[1],
        params["k_proj"], params["v_proj"], params["o_proj"], adaption_gate)
    return output, None, past_key_value


# pure-JAX reference of the fused adapter path (mirrors the torch code exactly)
def adapter_path_ref(base_output, query_states, adapter_states_k, adapter_states_v,
                     k_proj_w, v_proj_w, o_proj_w, adaption_gate):
    bsz, q_len, _ = base_output.shape
    prefix_len = adapter_states_k.shape[1]
    k = adapter_states_k @ k_proj_w.T
    v = adapter_states_v @ v_proj_w.T
    adapter_k = k.reshape(bsz, prefix_len, NUM_HEADS // FACTOR, HEAD_DIM).transpose(0, 2, 1, 3)
    adapter_v = v.reshape(bsz, prefix_len, NUM_HEADS // FACTOR, HEAD_DIM).transpose(0, 2, 1, 3)
    adapter_k = jnp.repeat(adapter_k, FACTOR, axis=1)            # repeat_interleave, dim=1
    adapter_v = jnp.repeat(adapter_v, FACTOR, axis=1)
    scores = jnp.einsum("bhqd,bhkd->bhqk", query_states, adapter_k) / math.sqrt(HEAD_DIM)
    probs = jax.nn.softmax(scores.astype(jnp.float32), axis=-1).astype(query_states.dtype)
    probs = adaption_gate[0] * probs
    ctx = jnp.einsum("bhqk,bhkd->bhqd", probs, adapter_v)
    adapter_output = ctx.transpose(0, 2, 1, 3).reshape(bsz, q_len, -1) @ o_proj_w.T
    return base_output + adapter_output


if __name__ == "__main__":
    key = jax.random.PRNGKey(0)
    k0, k1, k2, k3, k4, k5 = jax.random.split(key, 6)

    # deterministic "checkpoint-free" parameter init (nn.Linear weights are (out, in))
    params = {
        "q_proj": 0.02 * jax.random.normal(k0, (HIDDEN, HIDDEN), jnp.float32),
        "k_proj": 0.02 * jax.random.normal(k1, (NUM_KV_HEADS * HEAD_DIM, HIDDEN), jnp.float32),
        "v_proj": 0.02 * jax.random.normal(k2, (NUM_KV_HEADS * HEAD_DIM, HIDDEN), jnp.float32),
        "o_proj": 0.02 * jax.random.normal(k3, (HIDDEN, HIDDEN), jnp.float32),
    }
    # module __init__ sets adaption_gate = zeros(1); use a deterministic nonzero
    # "trained" value so the Pallas path actually contributes to the output.
    adaption_gate = jnp.array([0.25], dtype=jnp.float32)

    hidden_states = jax.random.normal(k4, (BSZ, Q_LEN, HIDDEN), jnp.float32)
    adapter_states = jax.random.normal(k5, (2, BSZ, PREFIX_LEN, HIDDEN), jnp.float32)

    forward = jax.jit(adapted_attention_forward)
    out, attn, past_kv = forward(hidden_states, adapter_states, adaption_gate, params)
    out = jax.block_until_ready(out)

    # verify the fused Pallas path against a pure-JAX reference of the same math
    base_out, _, _ = base_llama_attention(hidden_states, params)
    q = compute_query_states(hidden_states, params)
    want = adapter_path_ref(base_out, q, adapter_states[0], adapter_states[1],
                            params["k_proj"], params["v_proj"], params["o_proj"],
                            adaption_gate)

    assert out.shape == (BSZ, Q_LEN, HIDDEN)
    # tolerance accommodates the EUP approx reciprocal used in the fused softmax
    assert jnp.allclose(out, want, atol=1e-3, rtol=1e-3), "fused adapter attention mismatch"
    print("KERNEL_OK")
</pallas_src>

<mosaic_0001>
module attributes {stable_mosaic.version = 11 : i64} {
  func.func @kernel(%arg0: i32, %arg1: memref<1xf32, #tpu.memory_space<smem>>, %arg2: memref<1x8x32xf32, #tpu.memory_space<vmem>>, %arg3: memref<1x4x8x8xf32, #tpu.memory_space<vmem>>, %arg4: memref<1x8x32xf32, #tpu.memory_space<vmem>>, %arg5: memref<1x8x32xf32, #tpu.memory_space<vmem>>, %arg6: memref<16x32xf32, #tpu.memory_space<vmem>>, %arg7: memref<16x32xf32, #tpu.memory_space<vmem>>, %arg8: memref<32x32xf32, #tpu.memory_space<vmem>>, %arg9: memref<1x8x32xf32, #tpu.memory_space<vmem>>) attributes {dimension_semantics = [#tpu.dimension_semantics<parallel>], iteration_bounds = array<i64: 2>, scalar_prefetch = 0 : i64, scratch_operands = 0 : i64, tpu.core_type = #tpu.core_type<tc>, window_params = [{transform_indices = @transform_0, window_bounds = array<i64: 1>}, {transform_indices = @transform_1, window_bounds = array<i64: 1, 8, 32>}, {transform_indices = @transform_2, window_bounds = array<i64: 1, 4, 8, 8>}, {transform_indices = @transform_3, window_bounds = array<i64: 1, 8, 32>}, {transform_indices = @transform_4, window_bounds = array<i64: 1, 8, 32>}, {pipeline_mode = #tpu.pipeline_mode<synchronous>, transform_indices = @transform_5, window_bounds = array<i64: 16, 32>}, {pipeline_mode = #tpu.pipeline_mode<synchronous>, transform_indices = @transform_6, window_bounds = array<i64: 16, 32>}, {pipeline_mode = #tpu.pipeline_mode<synchronous>, transform_indices = @transform_7, window_bounds = array<i64: 32, 32>}, {transform_indices = @transform_8, window_bounds = array<i64: 1, 8, 32>}]} {
    %c0 = arith.constant 0 : index
    %0 = memref.load %arg1[%c0] : memref<1xf32, #tpu.memory_space<smem>>
    %c0_0 = arith.constant 0 : index
    %c0_1 = arith.constant 0 : index
    %c0_2 = arith.constant 0 : index
    %1 = vector.load %arg4[%c0_0, %c0_1, %c0_2] : memref<1x8x32xf32, #tpu.memory_space<vmem>>, vector<1x8x32xf32>
    %2 = vector.shape_cast %1 : vector<1x8x32xf32> to vector<8x32xf32>
    %c0_3 = arith.constant 0 : index
    %c0_4 = arith.constant 0 : index
    %c0_5 = arith.constant 0 : index
    %3 = vector.load %arg5[%c0_3, %c0_4, %c0_5] : memref<1x8x32xf32, #tpu.memory_space<vmem>>, vector<1x8x32xf32>
    %4 = vector.shape_cast %3 : vector<1x8x32xf32> to vector<8x32xf32>
    %c0_6 = arith.constant 0 : index
    %c0_7 = arith.constant 0 : index
    %5 = vector.load %arg6[%c0_6, %c0_7] : memref<16x32xf32, #tpu.memory_space<vmem>>, vector<8x32xf32>
    %c0_8 = arith.constant 0 : index
    %c0_9 = arith.constant 0 : index
    %6 = vector.load %arg7[%c0_8, %c0_9] : memref<16x32xf32, #tpu.memory_space<vmem>>, vector<8x32xf32>
    %cst = arith.constant dense<0.000000e+00> : vector<8x8xf32>
    %7 = tpu.matmul %2, %5, %cst {dimension_numbers = #tpu.dot_dimension_numbers<[1], [1], [0], [0], [0, 0, 1, 0], [], []>} : vector<8x32xf32>, vector<8x32xf32>, vector<8x8xf32> -> vector<8x8xf32>
    %cst_10 = arith.constant dense<0.000000e+00> : vector<8x8xf32>
    %8 = tpu.matmul %4, %6, %cst_10 {dimension_numbers = #tpu.dot_dimension_numbers<[1], [1], [0], [0], [0, 0, 1, 0], [], []>} : vector<8x32xf32>, vector<8x32xf32>, vector<8x8xf32> -> vector<8x8xf32>
    %c8 = arith.constant 8 : index
    %c0_11 = arith.constant 0 : index
    %9 = vector.load %arg6[%c8, %c0_11] : memref<16x32xf32, #tpu.memory_space<vmem>>, vector<8x32xf32>
    %c8_12 = arith.constant 8 : index
    %c0_13 = arith.constant 0 : index
    %10 = vector.load %arg7[%c8_12, %c0_13] : memref<16x32xf32, #tpu.memory_space<vmem>>, vector<8x32xf32>
    %cst_14 = arith.constant dense<0.000000e+00> : vector<8x8xf32>
    %11 = tpu.matmul %2, %9, %cst_14 {dimension_numbers = #tpu.dot_dimension_numbers<[1], [1], [0], [0], [0, 0, 1, 0], [], []>} : vector<8x32xf32>, vector<8x32xf32>, vector<8x8xf32> -> vector<8x8xf32>
    %cst_15 = arith.constant dense<0.000000e+00> : vector<8x8xf32>
    %12 = tpu.matmul %4, %10, %cst_15 {dimension_numbers = #tpu.dot_dimension_numbers<[1], [1], [0], [0], [0, 0, 1, 0], [], []>} : vector<8x32xf32>, vector<8x32xf32>, vector<8x8xf32> -> vector<8x8xf32>
    %c0_16 = arith.constant 0 : index
    %c0_17 = arith.constant 0 : index
    %c0_18 = arith.constant 0 : index
    %13 = vector.load %arg2[%c0_16, %c0_17, %c0_18] : memref<1x8x32xf32, #tpu.memory_space<vmem>>, vector<1x8x32xf32>
    %14 = vector.shape_cast %13 : vector<1x8x32xf32> to vector<8x32xf32>
    %c0_19 = arith.constant 0 : index
    %c0_20 = arith.constant 0 : index
    %c0_21 = arith.constant 0 : index
    %c0_22 = arith.constant 0 : index
    %15 = vector.load %arg3[%c0_19, %c0_20, %c0_21, %c0_22] : memref<1x4x8x8xf32, #tpu.memory_space<vmem>>, vector<1x1x8x8xf32>
    %16 = vector.shape_cast %15 : vector<1x1x8x8xf32> to vector<8x8xf32>
    %cst_23 = arith.constant dense<0.000000e+00> : vector<8x8xf32>
    %17 = tpu.matmul %16, %7, %cst_23 {dimension_numbers = #tpu.dot_dimension_numbers<[1], [1], [0], [0], [0, 0, 1, 0], [], []>} : vector<8x8xf32>, vector<8x8xf32>, vector<8x8xf32> -> vector<8x8xf32>
    %cst_24 = arith.constant 0.353553385 : f32
    %18 = vector.broadcast %cst_24 : f32 to vector<8x8xf32>
    %19 = arith.mulf %17, %18 : vector<8x8xf32>
    %cst_25 = arith.constant dense<0xFF800000> : vector<8xf32>
    %20 = vector.multi_reduction <maximumf>, %19, %cst_25 [1] : vector<8x8xf32> to vector<8xf32>
    %21 = vector.shape_cast %20 : vector<8xf32> to vector<8x1xf32>
    %22 = vector.broadcast %21 : vector<8x1xf32> to vector<8x8xf32>
    %23 = arith.subf %19, %22 : vector<8x8xf32>
    %24 = math.exp %23 : vector<8x8xf32>
    %cst_26 = arith.constant dense<0.000000e+00> : vector<8xf32>
    %25 = vector.multi_reduction <add>, %24, %cst_26 [1] : vector<8x8xf32> to vector<8xf32>
    %26 = vector.shape_cast %25 : vector<8xf32> to vector<8x1xf32>
    %27 = tpu.reciprocal %26 {approx = true} : vector<8x1xf32> -> vector<8x1xf32>
    %28 = vector.broadcast %0 : f32 to vector<8x1xf32>
    %29 = arith.mulf %28, %27 : vector<8x1xf32>
    %30 = vector.broadcast %29 : vector<8x1xf32> to vector<8x8xf32>
    %31 = arith.mulf %24, %30 : vector<8x8xf32>
    %cst_27 = arith.constant dense<0.000000e+00> : vector<8x8xf32>
    %32 = tpu.matmul %31, %8, %cst_27 {dimension_numbers = #tpu.dot_dimension_numbers<[1], [0], [0], [1], [0, 0, 1, 1], [], []>} : vector<8x8xf32>, vector<8x8xf32>, vector<8x8xf32> -> vector<8x8xf32>
    %c0_28 = arith.constant 0 : index
    %c0_29 = arith.constant 0 : index
    %33 = vector.load %arg8[%c0_28, %c0_29] : memref<32x32xf32, #tpu.memory_space<vmem>>, vector<32x8xf32>
    %cst_30 = arith.constant dense<0.000000e+00> : vector<8x32xf32>
    %34 = tpu.matmul %32, %33, %cst_30 {dimension_numbers = #tpu.dot_dimension_numbers<[1], [1], [0], [0], [0, 0, 1, 0], [], []>} : vector<8x8xf32>, vector<32x8xf32>, vector<8x32xf32> -> vector<8x32xf32>
    %35 = arith.addf %14, %34 : vector<8x32xf32>
    %c0_31 = arith.constant 0 : index
    %c1 = arith.constant 1 : index
    %c0_32 = arith.constant 0 : index
    %c0_33 = arith.constant 0 : index
    %36 = vector.load %arg3[%c0_31, %c1, %c0_32, %c0_33] : memref<1x4x8x8xf32, #tpu.memory_space<vmem>>, vector<1x1x8x8xf32>
    %37 = vector.shape_cast %36 : vector<1x1x8x8xf32> to vector<8x8xf32>
    %cst_34 = arith.constant dense<0.000000e+00> : vector<8x8xf32>
    %38 = tpu.matmul %37, %7, %cst_34 {dimension_numbers = #tpu.dot_dimension_numbers<[1], [1], [0], [0], [0, 0, 1, 0], [], []>} : vector<8x8xf32>, vector<8x8xf32>, vector<8x8xf32> -> vector<8x8xf32>
    %cst_35 = arith.constant 0.353553385 : f32
    %39 = vector.broadcast %cst_35 : f32 to vector<8x8xf32>
    %40 = arith.mulf %38, %39 : vector<8x8xf32>
    %cst_36 = arith.constant dense<0xFF800000> : vector<8xf32>
    %41 = vector.multi_reduction <maximumf>, %40, %cst_36 [1] : vector<8x8xf32> to vector<8xf32>
    %42 = vector.shape_cast %41 : vector<8xf32> to vector<8x1xf32>
    %43 = vector.broadcast %42 : vector<8x1xf32> to vector<8x8xf32>
    %44 = arith.subf %40, %43 : vector<8x8xf32>
    %45 = math.exp %44 : vector<8x8xf32>
    %cst_37 = arith.constant dense<0.000000e+00> : vector<8xf32>
    %46 = vector.multi_reduction <add>, %45, %cst_37 [1] : vector<8x8xf32> to vector<8xf32>
    %47 = vector.shape_cast %46 : vector<8xf32> to vector<8x1xf32>
    %48 = tpu.reciprocal %47 {approx = true} : vector<8x1xf32> -> vector<8x1xf32>
    %49 = vector.broadcast %0 : f32 to vector<8x1xf32>
    %50 = arith.mulf %49, %48 : vector<8x1xf32>
    %51 = vector.broadcast %50 : vector<8x1xf32> to vector<8x8xf32>
    %52 = arith.mulf %45, %51 : vector<8x8xf32>
    %cst_38 = arith.constant dense<0.000000e+00> : vector<8x8xf32>
    %53 = tpu.matmul %52, %8, %cst_38 {dimension_numbers = #tpu.dot_dimension_numbers<[1], [0], [0], [1], [0, 0, 1, 1], [], []>} : vector<8x8xf32>, vector<8x8xf32>, vector<8x8xf32> -> vector<8x8xf32>
    %c0_39 = arith.constant 0 : index
    %c8_40 = arith.constant 8 : index
    %54 = vector.load %arg8[%c0_39, %c8_40] : memref<32x32xf32, #tpu.memory_space<vmem>>, vector<32x8xf32>
    %cst_41 = arith.constant dense<0.000000e+00> : vector<8x32xf32>
    %55 = tpu.matmul %53, %54, %cst_41 {dimension_numbers = #tpu.dot_dimension_numbers<[1], [1], [0], [0], [0, 0, 1, 0], [], []>} : vector<8x8xf32>, vector<32x8xf32>, vector<8x32xf32> -> vector<8x32xf32>
    %56 = arith.addf %35, %55 : vector<8x32xf32>
    %c0_42 = arith.constant 0 : index
    %c2 = arith.constant 2 : index
    %c0_43 = arith.constant 0 : index
    %c0_44 = arith.constant 0 : index
    %57 = vector.load %arg3[%c0_42, %c2, %c0_43, %c0_44] : memref<1x4x8x8xf32, #tpu.memory_space<vmem>>, vector<1x1x8x8xf32>
    %58 = vector.shape_cast %57 : vector<1x1x8x8xf32> to vector<8x8xf32>
    %cst_45 = arith.constant dense<0.000000e+00> : vector<8x8xf32>
    %59 = tpu.matmul %58, %11, %cst_45 {dimension_numbers = #tpu.dot_dimension_numbers<[1], [1], [0], [0], [0, 0, 1, 0], [], []>} : vector<8x8xf32>, vector<8x8xf32>, vector<8x8xf32> -> vector<8x8xf32>
    %cst_46 = arith.constant 0.353553385 : f32
    %60 = vector.broadcast %cst_46 : f32 to vector<8x8xf32>
    %61 = arith.mulf %59, %60 : vector<8x8xf32>
    %cst_47 = arith.constant dense<0xFF800000> : vector<8xf32>
    %62 = vector.multi_reduction <maximumf>, %61, %cst_47 [1] : vector<8x8xf32> to vector<8xf32>
    %63 = vector.shape_cast %62 : vector<8xf32> to vector<8x1xf32>
    %64 = vector.broadcast %63 : vector<8x1xf32> to vector<8x8xf32>
    %65 = arith.subf %61, %64 : vector<8x8xf32>
    %66 = math.exp %65 : vector<8x8xf32>
    %cst_48 = arith.constant dense<0.000000e+00> : vector<8xf32>
    %67 = vector.multi_reduction <add>, %66, %cst_48 [1] : vector<8x8xf32> to vector<8xf32>
    %68 = vector.shape_cast %67 : vector<8xf32> to vector<8x1xf32>
    %69 = tpu.reciprocal %68 {approx = true} : vector<8x1xf32> -> vector<8x1xf32>
    %70 = vector.broadcast %0 : f32 to vector<8x1xf32>
    %71 = arith.mulf %70, %69 : vector<8x1xf32>
    %72 = vector.broadcast %71 : vector<8x1xf32> to vector<8x8xf32>
    %73 = arith.mulf %66, %72 : vector<8x8xf32>
    %cst_49 = arith.constant dense<0.000000e+00> : vector<8x8xf32>
    %74 = tpu.matmul %73, %12, %cst_49 {dimension_numbers = #tpu.dot_dimension_numbers<[1], [0], [0], [1], [0, 0, 1, 1], [], []>} : vector<8x8xf32>, vector<8x8xf32>, vector<8x8xf32> -> vector<8x8xf32>
    %c0_50 = arith.constant 0 : index
    %c16 = arith.constant 16 : index
    %75 = vector.load %arg8[%c0_50, %c16] : memref<32x32xf32, #tpu.memory_space<vmem>>, vector<32x8xf32>
    %cst_51 = arith.constant dense<0.000000e+00> : vector<8x32xf32>
    %76 = tpu.matmul %74, %75, %cst_51 {dimension_numbers = #tpu.dot_dimension_numbers<[1], [1], [0], [0], [0, 0, 1, 0], [], []>} : vector<8x8xf32>, vector<32x8xf32>, vector<8x32xf32> -> vector<8x32xf32>
    %77 = arith.addf %56, %76 : vector<8x32xf32>
    %c0_52 = arith.constant 0 : index
    %c3 = arith.constant 3 : index
    %c0_53 = arith.constant 0 : index
    %c0_54 = arith.constant 0 : index
    %78 = vector.load %arg3[%c0_52, %c3, %c0_53, %c0_54] : memref<1x4x8x8xf32, #tpu.memory_space<vmem>>, vector<1x1x8x8xf32>
    %79 = vector.shape_cast %78 : vector<1x1x8x8xf32> to vector<8x8xf32>
    %cst_55 = arith.constant dense<0.000000e+00> : vector<8x8xf32>
    %80 = tpu.matmul %79, %11, %cst_55 {dimension_numbers = #tpu.dot_dimension_numbers<[1], [1], [0], [0], [0, 0, 1, 0], [], []>} : vector<8x8xf32>, vector<8x8xf32>, vector<8x8xf32> -> vector<8x8xf32>
    %cst_56 = arith.constant 0.353553385 : f32
    %81 = vector.broadcast %cst_56 : f32 to vector<8x8xf32>
    %82 = arith.mulf %80, %81 : vector<8x8xf32>
    %cst_57 = arith.constant dense<0xFF800000> : vector<8xf32>
    %83 = vector.multi_reduction <maximumf>, %82, %cst_57 [1] : vector<8x8xf32> to vector<8xf32>
    %84 = vector.shape_cast %83 : vector<8xf32> to vector<8x1xf32>
    %85 = vector.broadcast %84 : vector<8x1xf32> to vector<8x8xf32>
    %86 = arith.subf %82, %85 : vector<8x8xf32>
    %87 = math.exp %86 : vector<8x8xf32>
    %cst_58 = arith.constant dense<0.000000e+00> : vector<8xf32>
    %88 = vector.multi_reduction <add>, %87, %cst_58 [1] : vector<8x8xf32> to vector<8xf32>
    %89 = vector.shape_cast %88 : vector<8xf32> to vector<8x1xf32>
    %90 = tpu.reciprocal %89 {approx = true} : vector<8x1xf32> -> vector<8x1xf32>
    %91 = vector.broadcast %0 : f32 to vector<8x1xf32>
    %92 = arith.mulf %91, %90 : vector<8x1xf32>
    %93 = vector.broadcast %92 : vector<8x1xf32> to vector<8x8xf32>
    %94 = arith.mulf %87, %93 : vector<8x8xf32>
    %cst_59 = arith.constant dense<0.000000e+00> : vector<8x8xf32>
    %95 = tpu.matmul %94, %12, %cst_59 {dimension_numbers = #tpu.dot_dimension_numbers<[1], [0], [0], [1], [0, 0, 1, 1], [], []>} : vector<8x8xf32>, vector<8x8xf32>, vector<8x8xf32> -> vector<8x8xf32>
    %c0_60 = arith.constant 0 : index
    %c24 = arith.constant 24 : index
    %96 = vector.load %arg8[%c0_60, %c24] : memref<32x32xf32, #tpu.memory_space<vmem>>, vector<32x8xf32>
    %cst_61 = arith.constant dense<0.000000e+00> : vector<8x32xf32>
    %97 = tpu.matmul %95, %96, %cst_61 {dimension_numbers = #tpu.dot_dimension_numbers<[1], [1], [0], [0], [0, 0, 1, 0], [], []>} : vector<8x8xf32>, vector<32x8xf32>, vector<8x32xf32> -> vector<8x32xf32>
    %98 = arith.addf %77, %97 : vector<8x32xf32>
    %c0_62 = arith.constant 0 : index
    %c0_63 = arith.constant 0 : index
    %c0_64 = arith.constant 0 : index
    %99 = vector.load %arg9[%c0_62, %c0_63, %c0_64] : memref<1x8x32xf32, #tpu.memory_space<vmem>>, vector<1x8x32xf32>
    %100 = vector.shape_cast %99 : vector<1x8x32xf32> to vector<8x32xf32>
    %101 = vector.shape_cast %98 : vector<8x32xf32> to vector<1x8x32xf32>
    tpu.vector_store %arg9[%c0_62, %c0_63, %c0_64], %101 {strides = array<i32>} : memref<1x8x32xf32, #tpu.memory_space<vmem>>, vector<1x8x32xf32>,
    return
  }
  func.func @transform_0(%arg0: i32) -> i32 {
    %c0_i32 = arith.constant 0 : i32
    %c0_i32_0 = arith.constant 0 : i32
    return %c0_i32 : i32
  }
  func.func @transform_1(%arg0: i32) -> (i32, i32, i32) {
    %c0_i32 = arith.constant 0 : i32
    %c0_i32_0 = arith.constant 0 : i32
    %c0_i32_1 = arith.constant 0 : i32
    return %arg0, %c0_i32, %c0_i32_0 : i32, i32, i32
  }
  func.func @transform_2(%arg0: i32) -> (i32, i32, i32, i32) {
    %c0_i32 = arith.constant 0 : i32
    %c0_i32_0 = arith.constant 0 : i32
    %c0_i32_1 = arith.constant 0 : i32
    %c0_i32_2 = arith.constant 0 : i32
    return %arg0, %c0_i32, %c0_i32_0, %c0_i32_1 : i32, i32, i32, i32
  }
  func.func @transform_3(%arg0: i32) -> (i32, i32, i32) {
    %c0_i32 = arith.constant 0 : i32
    %c0_i32_0 = arith.constant 0 : i32
    %c0_i32_1 = arith.constant 0 : i32
    return %arg0, %c0_i32, %c0_i32_0 : i32, i32, i32
  }
  func.func @transform_4(%arg0: i32) -> (i32, i32, i32) {
    %c0_i32 = arith.constant 0 : i32
    %c0_i32_0 = arith.constant 0 : i32
    %c0_i32_1 = arith.constant 0 : i32
    return %arg0, %c0_i32, %c0_i32_0 : i32, i32, i32
  }
  func.func @transform_5(%arg0: i32) -> (i32, i32) {
    %c0_i32 = arith.constant 0 : i32
    %c0_i32_0 = arith.constant 0 : i32
    %c0_i32_1 = arith.constant 0 : i32
    return %c0_i32, %c0_i32_0 : i32, i32
  }
  func.func @transform_6(%arg0: i32) -> (i32, i32) {
    %c0_i32 = arith.constant 0 : i32
    %c0_i32_0 = arith.constant 0 : i32
    %c0_i32_1 = arith.constant 0 : i32
    return %c0_i32, %c0_i32_0 : i32, i32
  }
  func.func @transform_7(%arg0: i32) -> (i32, i32) {
    %c0_i32 = arith.constant 0 : i32
    %c0_i32_0 = arith.constant 0 : i32
    %c0_i32_1 = arith.constant 0 : i32
    return %c0_i32, %c0_i32_0 : i32, i32
  }
  func.func @transform_8(%arg0: i32) -> (i32, i32, i32) {
    %c0_i32 = arith.constant 0 : i32
    %c0_i32_0 = arith.constant 0 : i32
    %c0_i32_1 = arith.constant 0 : i32
    return %arg0, %c0_i32, %c0_i32_0 : i32, i32, i32
  }
}

</mosaic_0001>

<llo_original>
// kernel: adapted_attention_forward.1
$region0: #{adapted_attention_forward.1}
  #allocation0 [shape = 'u32[]', space=smem, size = 0x4, offset = 0x4, fixed_abs, tag = 'smem constant byte address 0x4 - core index']
  #allocation1 [shape = 'u32[144,128]{1,0:T(1,128)}', space=vmem, size = 0x12000, scoped, tag = 'internal scratch']
  #allocation2 [shape = 'f32[1]{0:T(128)S(6)}', space=smem, size = 0x200, scoped, tag = 'scoped memory for adapted_attention_forward.1']
  %s0 = inlined_call_operand.<no memory space> [shape: f32[1], index: 0, kind: input, shape index: {}]
  %s1 = inlined_call_operand.vmem [shape: f32[2,8,32], index: 1, kind: input, shape index: {}, may-alias: {1,8}]
  %s2 = inlined_call_operand.vmem [shape: f32[2,4,8,8], index: 2, kind: input, shape index: {}]
  %s3 = inlined_call_operand.vmem [shape: f32[2,8,32], index: 3, kind: input, shape index: {}]
  %s4 = inlined_call_operand.vmem [shape: f32[2,8,32], index: 4, kind: input, shape index: {}]
  %s5 = inlined_call_operand.vmem [shape: f32[16,32], index: 5, kind: input, shape index: {}]
  %s6 = inlined_call_operand.vmem [shape: f32[16,32], index: 6, kind: input, shape index: {}]
  %s7 = inlined_call_operand.vmem [shape: f32[32,32], index: 7, kind: input, shape index: {}]
  %s8 = inlined_call_operand.vmem [shape: f32[2,8,32], index: 8, kind: output, shape index: {}, may-alias: {1,8}]
  %s9 = sld [smem:[#allocation0]]
  $region65: #{adapted_attention_forward.1} parent=0
    _
  %s11 = ssub.s32 1, %s9
  %s12 = scalar_select 0, %s11, %s9
  %13 = sst [smem:[#allocation2]] %s0
  loop: start=0, step=1, limit=4
  $region2: #{adapted_attention_forward.1} parent=0 // loop_pre_header
    _
  $region3: #{adapted_attention_forward.1} parent=0 // loop_header
    %s15 = sphi 0, %s19
    %p16 = scmp.ge.s32.totalorder %s15, 4
    %s23 = sphi 0, %s23
    %s25 = sphi 0, %s23
    %s26 = sphi 0, %s25
    %s40 = sphi 0, %s26
    %s46 = sphi 0, %s48
    %s49 = sphi 0, %s46
    %s50 = sphi 0, %s49
    %s66 = sphi 0, %s50
    %s72 = sphi 0, %s74
    %s75 = sphi 0, %s72
    %s76 = sphi 0, %s75
    %s92 = sphi 0, %s76
    %s98 = sphi 0, %s100
    %s101 = sphi 0, %s98
    %s102 = sphi 0, %s101
    %s118 = sphi 0, %s102
    %s124 = sphi 0, %s126
    %s127 = sphi 0, %s124
    %s128 = sphi 0, %s127
    %s144 = sphi 0, %s128
    %s148 = sphi 0, %s148
    %s150 = sphi 0, %s148
    %s151 = sphi 0, %s150
    %s165 = sphi 0, %s151
    %s169 = sphi 0, %s169
    %s171 = sphi 0, %s169
    %s172 = sphi 0, %s171
    %s186 = sphi 0, %s172
    %s190 = sphi 0, %s190
    %s192 = sphi 0, %s190
    %s193 = sphi 0, %s192
    %s207 = sphi 0, %s193
    %s213 = sphi 0, %s215
    %s216 = sphi 0, %s213
    %s217 = sphi 0, %s216
    %s233 = sphi 0, %s217
  $region4: #{adapted_attention_forward.1} parent=0 // loop_header_branch
    %18 = sbr.rel (%p16) target = $region8
  $region5: #{adapted_attention_forward.1} parent=0 // loop_body
    %s20 = ssub.s32 %s15, 1
    %s21 = ssub.s32 %s15, 2
    %s22 = sadd.s32 %s15, 1
    %s24 = sadd.s32 %s23, 1
    %p27 = scmp.eq.s32.totalorder %s15, 1
    %p28 = scmp.ne.s32.totalorder %s23, %s25
    %p29 = scmp.eq.s32.totalorder %s15, 0
    %p30 = por %p28, %p29
    %p31 = scmp.ne.s32.totalorder %s23, %s25
    %p32 = scmp.eq.s32.totalorder %s20, 1
    %p33 = por %p31, %p32
    %p34 = scmp.ne.s32.totalorder %s25, %s26
    %p35 = scmp.eq.s32.totalorder %s20, 0
    %p36 = por %p34, %p35
    %p37 = scmp.ne.s32.totalorder %s25, %s26
    %p38 = scmp.eq.s32.totalorder %s21, 1
    %p39 = por %p37, %p38
    %p41 = scmp.ne.s32.totalorder %s26, %s40
    %p42 = scmp.eq.s32.totalorder %s21, 0
    %p43 = por %p41, %p42
    %s44 = ssub.s32 %s15, %s22
    %p45 = scmp.eq.s32.totalorder %s44, 0
    %s47 = sadd.s32 %s46, 1
    %s48 = scalar_select %p45, %s46, %s47
    %p51 = pneg %p45
    %p52 = scmp.eq.s32.totalorder %s15, 1
    %p53 = por %p51, %p52
    %p54 = scmp.ne.s32.totalorder %s46, %s49
    %p55 = scmp.eq.s32.totalorder %s15, 0
    %p56 = por %p54, %p55
    %p57 = scmp.ne.s32.totalorder %s46, %s49
    %p58 = scmp.eq.s32.totalorder %s20, 1
    %p59 = por %p57, %p58
    %p60 = scmp.ne.s32.totalorder %s49, %s50
    %p61 = scmp.eq.s32.totalorder %s20, 0
    %p62 = por %p60, %p61
    %p63 = scmp.ne.s32.totalorder %s49, %s50
    %p64 = scmp.eq.s32.totalorder %s21, 1
    %p65 = por %p63, %p64
    %p67 = scmp.ne.s32.totalorder %s50, %s66
    %p68 = scmp.eq.s32.totalorder %s21, 0
    %p69 = por %p67, %p68
    %s70 = ssub.s32 %s15, %s22
    %p71 = scmp.eq.s32.totalorder %s70, 0
    %s73 = sadd.s32 %s72, 1
    %s74 = scalar_select %p71, %s72, %s73
    %p77 = pneg %p71
    %p78 = scmp.eq.s32.totalorder %s15, 1
    %p79 = por %p77, %p78
    %p80 = scmp.ne.s32.totalorder %s72, %s75
    %p81 = scmp.eq.s32.totalorder %s15, 0
    %p82 = por %p80, %p81
    %p83 = scmp.ne.s32.totalorder %s72, %s75
    %p84 = scmp.eq.s32.totalorder %s20, 1
    %p85 = por %p83, %p84
    %p86 = scmp.ne.s32.totalorder %s75, %s76
    %p87 = scmp.eq.s32.totalorder %s20, 0
    %p88 = por %p86, %p87
    %p89 = scmp.ne.s32.totalorder %s75, %s76
    %p90 = scmp.eq.s32.totalorder %s21, 1
    %p91 = por %p89, %p90
    %p93 = scmp.ne.s32.totalorder %s76, %s92
    %p94 = scmp.eq.s32.totalorder %s21, 0
    %p95 = por %p93, %p94
    %s96 = ssub.s32 %s15, %s22
    %p97 = scmp.eq.s32.totalorder %s96, 0
    %s99 = sadd.s32 %s98, 1
    %s100 = scalar_select %p97, %s98, %s99
    %p103 = pneg %p97
    %p104 = scmp.eq.s32.totalorder %s15, 1
    %p105 = por %p103, %p104
    %p106 = scmp.ne.s32.totalorder %s98, %s101
    %p107 = scmp.eq.s32.totalorder %s15, 0
    %p108 = por %p106, %p107
    %p109 = scmp.ne.s32.totalorder %s98, %s101
    %p110 = scmp.eq.s32.totalorder %s20, 1
    %p111 = por %p109, %p110
    %p112 = scmp.ne.s32.totalorder %s101, %s102
    %p113 = scmp.eq.s32.totalorder %s20, 0
    %p114 = por %p112, %p113
    %p115 = scmp.ne.s32.totalorder %s101, %s102
    %p116 = scmp.eq.s32.totalorder %s21, 1
    %p117 = por %p115, %p116
    %p119 = scmp.ne.s32.totalorder %s102, %s118
    %p120 = scmp.eq.s32.totalorder %s21, 0
    %p121 = por %p119, %p120
    %s122 = ssub.s32 %s15, %s22
    %p123 = scmp.eq.s32.totalorder %s122, 0
    %s125 = sadd.s32 %s124, 1
    %s126 = scalar_select %p123, %s124, %s125
    %p129 = pneg %p123
    %p130 = scmp.eq.s32.totalorder %s15, 1
    %p131 = por %p129, %p130
    %p132 = scmp.ne.s32.totalorder %s124, %s127
    %p133 = scmp.eq.s32.totalorder %s15, 0
    %p134 = por %p132, %p133
    %p135 = scmp.ne.s32.totalorder %s124, %s127
    %p136 = scmp.eq.s32.totalorder %s20, 1
    %p137 = por %p135, %p136
    %p138 = scmp.ne.s32.totalorder %s127, %s128
    %p139 = scmp.eq.s32.totalorder %s20, 0
    %p140 = por %p138, %p139
    %p141 = scmp.ne.s32.totalorder %s127, %s128
    %p142 = scmp.eq.s32.totalorder %s21, 1
    %p143 = por %p141, %p142
    %p145 = scmp.ne.s32.totalorder %s128, %s144
    %p146 = scmp.eq.s32.totalorder %s21, 0
    %p147 = por %p145, %p146
    %s149 = sadd.s32 %s148, 1
    %p152 = scmp.eq.s32.totalorder %s15, 1
    %p153 = scmp.ne.s32.totalorder %s148, %s150
    %p154 = scmp.eq.s32.totalorder %s15, 0
    %p155 = por %p153, %p154
    %p156 = scmp.ne.s32.totalorder %s148, %s150
    %p157 = scmp.eq.s32.totalorder %s20, 1
    %p158 = por %p156, %p157
    %p159 = scmp.ne.s32.totalorder %s150, %s151
    %p160 = scmp.eq.s32.totalorder %s20, 0
    %p161 = por %p159, %p160
    %p162 = scmp.ne.s32.totalorder %s150, %s151
    %p163 = scmp.eq.s32.totalorder %s21, 1
    %p164 = por %p162, %p163
    %p166 = scmp.ne.s32.totalorder %s151, %s165
    %p167 = scmp.eq.s32.totalorder %s21, 0
    %p168 = por %p166, %p167
    %s170 = sadd.s32 %s169, 1
    %p173 = scmp.eq.s32.totalorder %s15, 1
    %p174 = scmp.ne.s32.totalorder %s169, %s171
    %p175 = scmp.eq.s32.totalorder %s15, 0
    %p176 = por %p174, %p175
    %p177 = scmp.ne.s32.totalorder %s169, %s171
    %p178 = scmp.eq.s32.totalorder %s20, 1
    %p179 = por %p177, %p178
    %p180 = scmp.ne.s32.totalorder %s171, %s172
    %p181 = scmp.eq.s32.totalorder %s20, 0
    %p182 = por %p180, %p181
    %p183 = scmp.ne.s32.totalorder %s171, %s172
    %p184 = scmp.eq.s32.totalorder %s21, 1
    %p185 = por %p183, %p184
    %p187 = scmp.ne.s32.totalorder %s172, %s186
    %p188 = scmp.eq.s32.totalorder %s21, 0
    %p189 = por %p187, %p188
    %s191 = sadd.s32 %s190, 1
    %p194 = scmp.eq.s32.totalorder %s15, 1
    %p195 = scmp.ne.s32.totalorder %s190, %s192
    %p196 = scmp.eq.s32.totalorder %s15, 0
    %p197 = por %p195, %p196
    %p198 = scmp.ne.s32.totalorder %s190, %s192
    %p199 = scmp.eq.s32.totalorder %s20, 1
    %p200 = por %p198, %p199
    %p201 = scmp.ne.s32.totalorder %s192, %s193
    %p202 = scmp.eq.s32.totalorder %s20, 0
    %p203 = por %p201, %p202
    %p204 = scmp.ne.s32.totalorder %s192, %s193
    %p205 = scmp.eq.s32.totalorder %s21, 1
    %p206 = por %p204, %p205
    %p208 = scmp.ne.s32.totalorder %s193, %s207
    %p209 = scmp.eq.s32.totalorder %s21, 0
    %p210 = por %p208, %p209
    %s211 = ssub.s32 %s15, %s22
    %p212 = scmp.eq.s32.totalorder %s211, 0
    %s214 = sadd.s32 %s213, 1
    %s215 = scalar_select %p212, %s213, %s214
    %p218 = pneg %p212
    %p219 = scmp.eq.s32.totalorder %s15, 1
    %p220 = por %p218, %p219
    %p221 = scmp.ne.s32.totalorder %s213, %s216
    %p222 = scmp.eq.s32.totalorder %s15, 0
    %p223 = por %p221, %p222
    %p224 = scmp.ne.s32.totalorder %s213, %s216
    %p225 = scmp.eq.s32.totalorder %s20, 1
    %p226 = por %p224, %p225
    %p227 = scmp.ne.s32.totalorder %s216, %s217
    %p228 = scmp.eq.s32.totalorder %s20, 0
    %p229 = por %p227, %p228
    %p230 = scmp.ne.s32.totalorder %s216, %s217
    %p231 = scmp.eq.s32.totalorder %s21, 1
    %p232 = por %p230, %p231
    %p234 = scmp.ne.s32.totalorder %s217, %s233
    %p235 = scmp.eq.s32.totalorder %s21, 0
    %p236 = por %p234, %p235
    %p237 = scmp.le.s32.totalorder 1, %s15
    %p238 = scmp.lt.s32.totalorder %s15, 3
    %p239 = pnand %p237, %p238
    %p240 = pneg %p239
    // Predicated region
    $region9: #{adapted_attention_forward.1} parent=5 // pred_check
      _
    $region10: #{adapted_attention_forward.1} parent=5 // pred_check_branch
      %242 = sbr.rel (%p239) target = $region12
    $region11: #{adapted_attention_forward.1} parent=5 // pred_region
      %s243 = ssub.s32 %s15, 1
      // Predicated region
      $region13: #{adapted_attention_forward.1} parent=11 // pred_check
        %p244 = pneg %p36
      $region14: #{adapted_attention_forward.1} parent=11 // pred_check_branch
        %246 = sbr.rel (%p244) target = $region16
      $region15: #{adapted_attention_forward.1} parent=11 // pred_region
        _
      $region16: #{adapted_attention_forward.1} parent=11 // pred_fallthru
        _
      // Predicated region
      $region17: #{adapted_attention_forward.1} parent=11 // pred_check
        %p247 = pneg %p161
      $region18: #{adapted_attention_forward.1} parent=11 // pred_check_branch
        %249 = sbr.rel (%p247) target = $region20
      $region19: #{adapted_attention_forward.1} parent=11 // pred_region
        _
      $region20: #{adapted_attention_forward.1} parent=11 // pred_fallthru
        _
      // Predicated region
      $region21: #{adapted_attention_forward.1} parent=11 // pred_check
        %p250 = pneg %p182
      $region22: #{adapted_attention_forward.1} parent=11 // pred_check_branch
        %252 = sbr.rel (%p250) target = $region24
      $region23: #{adapted_attention_forward.1} parent=11 // pred_region
        _
      $region24: #{adapted_attention_forward.1} parent=11 // pred_fallthru
        _
      // Predicated region
      $region25: #{adapted_attention_forward.1} parent=11 // pred_check
        %p253 = pneg %p203
      $region26: #{adapted_attention_forward.1} parent=11 // pred_check_branch
        %255 = sbr.rel (%p253) target = $region28
      $region27: #{adapted_attention_forward.1} parent=11 // pred_region
        _
      $region28: #{adapted_attention_forward.1} parent=11 // pred_fallthru
        _
    $region12: #{adapted_attention_forward.1} parent=5 // pred_fallthru
      _
    %p256 = scmp.lt.s32.totalorder %s15, 2
    // Predicated region
    $region29: #{adapted_attention_forward.1} parent=5 // pred_check
      %p257 = pneg %p256
    $region30: #{adapted_attention_forward.1} parent=5 // pred_check_branch
      %259 = sbr.rel (%p257) target = $region32
    $region31: #{adapted_attention_forward.1} parent=5 // pred_region
      // Predicated region
      $region33: #{adapted_attention_forward.1} parent=31 // pred_check
        %p260 = pneg %p56
      $region34: #{adapted_attention_forward.1} parent=31 // pred_check_branch
        %262 = sbr.rel (%p260) target = $region36
      $region35: #{adapted_attention_forward.1} parent=31 // pred_region
        %p263 = scmp.lt.s32.totalorder %s15, 1
        %s264 = scalar_select %p263, %s15, 1
        %s265 = smul.addr %s264, 8
        %s266 = scalar_lea.vmem %s1, %s265
      $region36: #{adapted_attention_forward.1} parent=31 // pred_fallthru
        _
      // Predicated region
      $region37: #{adapted_attention_forward.1} parent=31 // pred_check
        %p267 = pneg %p82
      $region38: #{adapted_attention_forward.1} parent=31 // pred_check_branch
        %269 = sbr.rel (%p267) target = $region40
      $region39: #{adapted_attention_forward.1} parent=31 // pred_region
        %p270 = scmp.lt.s32.totalorder %s15, 1
        %s271 = scalar_select %p270, %s15, 1
        %s272 = smul.addr %s271, 4
        %s273 = smul.addr %s272, 8
        %s274 = scalar_lea.vmem %s2, %s273
      $region40: #{adapted_attention_forward.1} parent=31 // pred_fallthru
        _
      // Predicated region
      $region41: #{adapted_attention_forward.1} parent=31 // pred_check
        %p275 = pneg %p108
      $region42: #{adapted_attention_forward.1} parent=31 // pred_check_branch
        %277 = sbr.rel (%p275) target = $region44
      $region43: #{adapted_attention_forward.1} parent=31 // pred_region
        %p278 = scmp.lt.s32.totalorder %s15, 1
        %s279 = scalar_select %p278, %s15, 1
        %s280 = smul.addr %s279, 8
        %s281 = scalar_lea.vmem %s3, %s280
      $region44: #{adapted_attention_forward.1} parent=31 // pred_fallthru
        _
      // Predicated region
      $region45: #{adapted_attention_forward.1} parent=31 // pred_check
        %p282 = pneg %p134
      $region46: #{adapted_attention_forward.1} parent=31 // pred_check_branch
        %284 = sbr.rel (%p282) target = $region48
      $region47: #{adapted_attention_forward.1} parent=31 // pred_region
        %p285 = scmp.lt.s32.totalorder %s15, 1
        %s286 = scalar_select %p285, %s15, 1
        %s287 = smul.addr %s286, 8
        %s288 = scalar_lea.vmem %s4, %s287
      $region48: #{adapted_attention_forward.1} parent=31 // pred_fallthru
        _
    $region32: #{adapted_attention_forward.1} parent=5 // pred_fallthru
      _
    %p289 = scmp.le.s32.totalorder 1, %s15
    %p290 = scmp.lt.s32.totalorder %s15, 3
    %p291 = pnand %p289, %p290
    %p292 = pneg %p291
    // Predicated region
    $region49: #{adapted_attention_forward.1} parent=5 // pred_check
      _
    $region50: #{adapted_attention_forward.1} parent=5 // pred_check_branch
      %294 = sbr.rel (%p291) target = $region52
    $region51: #{adapted_attention_forward.1} parent=5 // pred_region
      %s295 = ssub.s32 %s15, 1
      %p296 = pneg %p36
      %p297 = pneg %p33
      %p298 = scmp.lt.s32.totalorder %s20, 1
      %s299 = scalar_select %p298, %s20, 1
      %s300 = smul.addr %s299, 8
      %s301 = scalar_lea.vmem %s1, %s300
      %p302 = pneg %p62
      %p303 = pneg %p59
      %p304 = scmp.lt.s32.totalorder %s20, 1
      %s305 = scalar_select %p304, %s20, 1
      %s306 = smul.addr %s305, 4
      %s307 = smul.addr %s306, 8
      %s308 = scalar_lea.vmem %s2, %s307
      %p309 = pneg %p88
      %p310 = pneg %p85
      %p311 = scmp.lt.s32.totalorder %s20, 1
      %s312 = scalar_select %p311, %s20, 1
      %s313 = smul.addr %s312, 8
      %s314 = scalar_lea.vmem %s3, %s313
      %p315 = pneg %p114
      %p316 = pneg %p111
      %p317 = scmp.lt.s32.totalorder %s20, 1
      %s318 = scalar_select %p317, %s20, 1
      %s319 = smul.addr %s318, 8
      %s320 = scalar_lea.vmem %s4, %s319
      %p321 = pneg %p140
      %p322 = pneg %p137
      %p323 = pneg %p161
      %p324 = pneg %p158
      %p325 = pneg %p182
      %p326 = pneg %p179
      %p327 = pneg %p203
      %p328 = pneg %p200
      %p329 = pneg %p229
      %p330 = pneg %p226
      %p331 = scmp.lt.s32.totalorder %s20, 1
      %s332 = scalar_select %p331, %s20, 1
      %s333 = smul.addr %s332, 8
      %s334 = scalar_lea.vmem %s8, %s333
      %p335 = scmp.lt.s32.totalorder %s20, 1
      %s336 = scalar_select %p335, %s20, 1
      %s337 = smul.addr %s336, 8
      %s338 = scalar_lea.vmem %s1, %s337
      %p339 = scmp.lt.s32.totalorder %s20, 1
      %s340 = scalar_select %p339, %s20, 1
      %s341 = smul.addr %s340, 4
      %s342 = smul.addr %s341, 8
      %s343 = scalar_lea.vmem %s2, %s342
      %p344 = scmp.lt.s32.totalorder %s20, 1
      %s345 = scalar_select %p344, %s20, 1
      %s346 = smul.addr %s345, 8
      %s347 = scalar_lea.vmem %s3, %s346
      %p348 = scmp.lt.s32.totalorder %s20, 1
      %s349 = scalar_select %p348, %s20, 1
      %s350 = smul.addr %s349, 8
      %s351 = scalar_lea.vmem %s4, %s350
      %p352 = scmp.lt.s32.totalorder %s20, 1
      %s353 = scalar_select %p352, %s20, 1
      %s354 = smul.addr %s353, 8
      %s355 = scalar_lea.vmem %s8, %s354
      %s356 = sld [smem:[#allocation2]]
      %v357 = vld [vmem:[%s347] sm:$0xff]
      %v358 = vld [vmem:[%s351] sm:$0xff]
      %v359 = vld [vmem:[%s5] sm:$0xff]
      %v360 = vld [vmem:[%s6] sm:$0xff]
      %vm361 = vcmask 261120
      %v363 = vsel %vm361, %v357, 0
      %v366 = vsel %vm361, %v359, 0
      %368 = vmatprep.subr.mxu0 0.0
      %369 = vmatpush1.xpose.msra.mxu0 %v366
      %370 = vmatprep.subr.mxu0 0.0
      %371 = vmatpush1.xpose.msra.mxu0 0.0
      %372 = vmatprep.subr.mxu0 0.0
      %373 = vmatpush1.xpose.msra.mxu0 0.0
      %374 = vmatprep.subr.mxu0 0.0
      %375 = vmatpush1.xpose.msra.mxu0 0.0
      %376 = vmatprep.subr.mxu0 0.0
      %377 = vmatpush1.xpose.msra.mxu0 0.0
      %378 = vmatprep.subr.mxu0 0.0
      %379 = vmatpush1.xpose.msra.mxu0 0.0
      %380 = vmatprep.subr.mxu0 0.0
      %381 = vmatpush1.xpose.msra.mxu0 0.0
      %382 = vmatprep.subr.mxu0 0.0
      %383 = vmatpush1.xpose.msra.mxu0 0.0
      %384 = vmatprep.subr.mxu0 0.0
      %385 = vmatpush1.xpose.msra.mxu0 0.0
      %386 = vmatprep.subr.mxu0 0.0
      %387 = vmatpush1.xpose.msra.mxu0 0.0
      %388 = vmatprep.subr.mxu0 0.0
      %389 = vmatpush1.xpose.msra.mxu0 0.0
      %390 = vmatprep.subr.mxu0 0.0
      %391 = vmatpush1.xpose.msra.mxu0 0.0
      %392 = vmatprep.subr.mxu0 0.0
      %393 = vmatpush1.xpose.msra.mxu0 0.0
      %394 = vmatprep.subr.mxu0 0.0
      %395 = vmatpush1.xpose.msra.mxu0 0.0
      %396 = vmatprep.subr.mxu0 0.0
      %397 = vmatpush1.xpose.msra.mxu0 0.0
      %398 = vmatprep.subr.mxu0 0.0
      %399 = vmatpush1.xpose.msra.mxu0 0.0
      %400 = vmatprep.subr.mxu0 0.0
      %401 = vmatpush1.xpose.msra.mxu0 0.0
      %402 = vmatprep.subr.mxu0 0.0
      %403 = vmatpush1.xpose.msra.mxu0 0.0
      %404 = vmatprep.subr.mxu0 0.0
      %405 = vmatpush1.xpose.msra.mxu0 0.0
      %406 = vmatprep.subr.mxu0 0.0
      %407 = vmatpush1.xpose.msra.mxu0 0.0
      %408 = vmatprep.subr.mxu0 0.0
      %409 = vmatpush1.xpose.msra.mxu0 0.0
      %410 = vmatprep.subr.mxu0 0.0
      %411 = vmatpush1.xpose.msra.mxu0 0.0
      %412 = vmatprep.subr.mxu0 0.0
      %413 = vmatpush1.xpose.msra.mxu0 0.0
      %414 = vmatprep.subr.mxu0 0.0
      %415 = vmatpush1.xpose.msra.mxu0 0.0
      %416 = vmatprep.subr.mxu0 0.0
      %417 = vmatpush1.xpose.msra.mxu0 0.0
      %418 = vmatprep.subr.mxu0 0.0
      %419 = vmatpush1.xpose.msra.mxu0 0.0
      %420 = vmatprep.subr.mxu0 0.0
      %421 = vmatpush1.xpose.msra.mxu0 0.0
      %422 = vmatprep.subr.mxu0 0.0
      %423 = vmatpush1.xpose.msra.mxu0 0.0
      %424 = vmatprep.subr.mxu0 0.0
      %425 = vmatpush1.xpose.msra.mxu0 0.0
      %426 = vmatprep.subr.mxu0 0.0
      %427 = vmatpush1.xpose.msra.mxu0 0.0
      %428 = vmatprep.subr.mxu0 0.0
      %429 = vmatpush1.xpose.msra.mxu0 0.0
      %430 = vmatprep.subr.mxu0 0.0
      %431 = vmatpush1.xpose.msra.mxu0 0.0
      %432 = vmatprep.mubr.f32.mxu0 0.0
      %433 = vmatmul.mubr.f32.gmra.mrb[0].mxu0 %v363
      %v434 = vpop.f32.mrb[0].mxu0
      %v435 = vadd.f32 0.0, %v434
      %v436 = vpop.f32.mrb[0].mxu0
      %437 = vdwg.mxu0
      %v439 = vsel %vm361, %v358, 0
      %v442 = vsel %vm361, %v360, 0
      %444 = vmatprep.subr.mxu0 0.0
      %445 = vmatpush1.xpose.msra.mxu0 %v442
      %446 = vmatprep.subr.mxu0 0.0
      %447 = vmatpush1.xpose.msra.mxu0 0.0
      %448 = vmatprep.subr.mxu0 0.0
      %449 = vmatpush1.xpose.msra.mxu0 0.0
      %450 = vmatprep.subr.mxu0 0.0
      %451 = vmatpush1.xpose.msra.mxu0 0.0
      %452 = vmatprep.subr.mxu0 0.0
      %453 = vmatpush1.xpose.msra.mxu0 0.0
      %454 = vmatprep.subr.mxu0 0.0
      %455 = vmatpush1.xpose.msra.mxu0 0.0
      %456 = vmatprep.subr.mxu0 0.0
      %457 = vmatpush1.xpose.msra.mxu0 0.0
      %458 = vmatprep.subr.mxu0 0.0
      %459 = vmatpush1.xpose.msra.mxu0 0.0
      %460 = vmatprep.subr.mxu0 0.0
      %461 = vmatpush1.xpose.msra.mxu0 0.0
      %462 = vmatprep.subr.mxu0 0.0
      %463 = vmatpush1.xpose.msra.mxu0 0.0
      %464 = vmatprep.subr.mxu0 0.0
      %465 = vmatpush1.xpose.msra.mxu0 0.0
      %466 = vmatprep.subr.mxu0 0.0
      %467 = vmatpush1.xpose.msra.mxu0 0.0
      %468 = vmatprep.subr.mxu0 0.0
      %469 = vmatpush1.xpose.msra.mxu0 0.0
      %470 = vmatprep.subr.mxu0 0.0
      %471 = vmatpush1.xpose.msra.mxu0 0.0
      %472 = vmatprep.subr.mxu0 0.0
      %473 = vmatpush1.xpose.msra.mxu0 0.0
      %474 = vmatprep.subr.mxu0 0.0
      %475 = vmatpush1.xpose.msra.mxu0 0.0
      %476 = vmatprep.subr.mxu0 0.0
      %477 = vmatpush1.xpose.msra.mxu0 0.0
      %478 = vmatprep.subr.mxu0 0.0
      %479 = vmatpush1.xpose.msra.mxu0 0.0
      %480 = vmatprep.subr.mxu0 0.0
      %481 = vmatpush1.xpose.msra.mxu0 0.0
      %482 = vmatprep.subr.mxu0 0.0
      %483 = vmatpush1.xpose.msra.mxu0 0.0
      %484 = vmatprep.subr.mxu0 0.0
      %485 = vmatpush1.xpose.msra.mxu0 0.0
      %486 = vmatprep.subr.mxu0 0.0
      %487 = vmatpush1.xpose.msra.mxu0 0.0
      %488 = vmatprep.subr.mxu0 0.0
      %489 = vmatpush1.xpose.msra.mxu0 0.0
      %490 = vmatprep.subr.mxu0 0.0
      %491 = vmatpush1.xpose.msra.mxu0 0.0
      %492 = vmatprep.subr.mxu0 0.0
      %493 = vmatpush1.xpose.msra.mxu0 0.0
      %494 = vmatprep.subr.mxu0 0.0
      %495 = vmatpush1.xpose.msra.mxu0 0.0
      %496 = vmatprep.subr.mxu0 0.0
      %497 = vmatpush1.xpose.msra.mxu0 0.0
      %498 = vmatprep.subr.mxu0 0.0
      %499 = vmatpush1.xpose.msra.mxu0 0.0
      %500 = vmatprep.subr.mxu0 0.0
      %501 = vmatpush1.xpose.msra.mxu0 0.0
      %502 = vmatprep.subr.mxu0 0.0
      %503 = vmatpush1.xpose.msra.mxu0 0.0
      %504 = vmatprep.subr.mxu0 0.0
      %505 = vmatpush1.xpose.msra.mxu0 0.0
      %506 = vmatprep.subr.mxu0 0.0
      %507 = vmatpush1.xpose.msra.mxu0 0.0
      %508 = vmatprep.mubr.f32.mxu0 0.0
      %509 = vmatmul.mubr.f32.gmra.mrb[0].mxu0 %v439
      %v510 = vpop.f32.mrb[0].mxu0
      %v511 = vadd.f32 0.0, %v510
      %v512 = vpop.f32.mrb[0].mxu0
      %513 = vdwg.mxu0
      %v514 = vld [vmem:[%s5 + $0x8] sm:$0xff]
      %v515 = vld [vmem:[%s6 + $0x8] sm:$0xff]
      %v517 = vsel %vm361, %v514, 0
      %519 = vmatprep.subr.mxu0 0.0
      %520 = vmatpush1.xpose.msra.mxu0 %v517
      %521 = vmatprep.subr.mxu0 0.0
      %522 = vmatpush1.xpose.msra.mxu0 0.0
      %523 = vmatprep.subr.mxu0 0.0
      %524 = vmatpush1.xpose.msra.mxu0 0.0
      %525 = vmatprep.subr.mxu0 0.0
      %526 = vmatpush1.xpose.msra.mxu0 0.0
      %527 = vmatprep.subr.mxu0 0.0
      %528 = vmatpush1.xpose.msra.mxu0 0.0
      %529 = vmatprep.subr.mxu0 0.0
      %530 = vmatpush1.xpose.msra.mxu0 0.0
      %531 = vmatprep.subr.mxu0 0.0
      %532 = vmatpush1.xpose.msra.mxu0 0.0
      %533 = vmatprep.subr.mxu0 0.0
      %534 = vmatpush1.xpose.msra.mxu0 0.0
      %535 = vmatprep.subr.mxu0 0.0
      %536 = vmatpush1.xpose.msra.mxu0 0.0
      %537 = vmatprep.subr.mxu0 0.0
      %538 = vmatpush1.xpose.msra.mxu0 0.0
      %539 = vmatprep.subr.mxu0 0.0
      %540 = vmatpush1.xpose.msra.mxu0 0.0
      %541 = vmatprep.subr.mxu0 0.0
      %542 = vmatpush1.xpose.msra.mxu0 0.0
      %543 = vmatprep.subr.mxu0 0.0
      %544 = vmatpush1.xpose.msra.mxu0 0.0
      %545 = vmatprep.subr.mxu0 0.0
      %546 = vmatpush1.xpose.msra.mxu0 0.0
      %547 = vmatprep.subr.mxu0 0.0
      %548 = vmatpush1.xpose.msra.mxu0 0.0
      %549 = vmatprep.subr.mxu0 0.0
      %550 = vmatpush1.xpose.msra.mxu0 0.0
      %551 = vmatprep.subr.mxu0 0.0
      %552 = vmatpush1.xpose.msra.mxu0 0.0
      %553 = vmatprep.subr.mxu0 0.0
      %554 = vmatpush1.xpose.msra.mxu0 0.0
      %555 = vmatprep.subr.mxu0 0.0
      %556 = vmatpush1.xpose.msra.mxu0 0.0
      %557 = vmatprep.subr.mxu0 0.0
      %558 = vmatpush1.xpose.msra.mxu0 0.0
      %559 = vmatprep.subr.mxu0 0.0
      %560 = vmatpush1.xpose.msra.mxu0 0.0
      %561 = vmatprep.subr.mxu0 0.0
      %562 = vmatpush1.xpose.msra.mxu0 0.0
      %563 = vmatprep.subr.mxu0 0.0
      %564 = vmatpush1.xpose.msra.mxu0 0.0
      %565 = vmatprep.subr.mxu0 0.0
      %566 = vmatpush1.xpose.msra.mxu0 0.0
      %567 = vmatprep.subr.mxu0 0.0
      %568 = vmatpush1.xpose.msra.mxu0 0.0
      %569 = vmatprep.subr.mxu0 0.0
      %570 = vmatpush1.xpose.msra.mxu0 0.0
      %571 = vmatprep.subr.mxu0 0.0
      %572 = vmatpush1.xpose.msra.mxu0 0.0
      %573 = vmatprep.subr.mxu0 0.0
      %574 = vmatpush1.xpose.msra.mxu0 0.0
      %575 = vmatprep.subr.mxu0 0.0
      %576 = vmatpush1.xpose.msra.mxu0 0.0
      %577 = vmatprep.subr.mxu0 0.0
      %578 = vmatpush1.xpose.msra.mxu0 0.0
      %579 = vmatprep.subr.mxu0 0.0
      %580 = vmatpush1.xpose.msra.mxu0 0.0
      %581 = vmatprep.subr.mxu0 0.0
      %582 = vmatpush1.xpose.msra.mxu0 0.0
      %583 = vmatprep.mubr.f32.mxu0 0.0
      %584 = vmatmul.mubr.f32.gmra.mrb[0].mxu0 %v363
      %v585 = vpop.f32.mrb[0].mxu0
      %v586 = vadd.f32 0.0, %v585
      %v587 = vpop.f32.mrb[0].mxu0
      %588 = vdwg.mxu0
      %v590 = vsel %vm361, %v515, 0
      %592 = vmatprep.subr.mxu0 0.0
      %593 = vmatpush1.xpose.msra.mxu0 %v590
      %594 = vmatprep.subr.mxu0 0.0
      %595 = vmatpush1.xpose.msra.mxu0 0.0
      %596 = vmatprep.subr.mxu0 0.0
      %597 = vmatpush1.xpose.msra.mxu0 0.0
      %598 = vmatprep.subr.mxu0 0.0
      %599 = vmatpush1.xpose.msra.mxu0 0.0
      %600 = vmatprep.subr.mxu0 0.0
      %601 = vmatpush1.xpose.msra.mxu0 0.0
      %602 = vmatprep.subr.mxu0 0.0
      %603 = vmatpush1.xpose.msra.mxu0 0.0
      %604 = vmatprep.subr.mxu0 0.0
      %605 = vmatpush1.xpose.msra.mxu0 0.0
      %606 = vmatprep.subr.mxu0 0.0
      %607 = vmatpush1.xpose.msra.mxu0 0.0
      %608 = vmatprep.subr.mxu0 0.0
      %609 = vmatpush1.xpose.msra.mxu0 0.0
      %610 = vmatprep.subr.mxu0 0.0
      %611 = vmatpush1.xpose.msra.mxu0 0.0
      %612 = vmatprep.subr.mxu0 0.0
      %613 = vmatpush1.xpose.msra.mxu0 0.0
      %614 = vmatprep.subr.mxu0 0.0
      %615 = vmatpush1.xpose.msra.mxu0 0.0
      %616 = vmatprep.subr.mxu0 0.0
      %617 = vmatpush1.xpose.msra.mxu0 0.0
      %618 = vmatprep.subr.mxu0 0.0
      %619 = vmatpush1.xpose.msra.mxu0 0.0
      %620 = vmatprep.subr.mxu0 0.0
      %621 = vmatpush1.xpose.msra.mxu0 0.0
      %622 = vmatprep.subr.mxu0 0.0
      %623 = vmatpush1.xpose.msra.mxu0 0.0
      %624 = vmatprep.subr.mxu0 0.0
      %625 = vmatpush1.xpose.msra.mxu0 0.0
      %626 = vmatprep.subr.mxu0 0.0
      %627 = vmatpush1.xpose.msra.mxu0 0.0
      %628 = vmatprep.subr.mxu0 0.0
      %629 = vmatpush1.xpose.msra.mxu0 0.0
      %630 = vmatprep.subr.mxu0 0.0
      %631 = vmatpush1.xpose.msra.mxu0 0.0
      %632 = vmatprep.subr.mxu0 0.0
      %633 = vmatpush1.xpose.msra.mxu0 0.0
      %634 = vmatprep.subr.mxu0 0.0
      %635 = vmatpush1.xpose.msra.mxu0 0.0
      %636 = vmatprep.subr.mxu0 0.0
      %637 = vmatpush1.xpose.msra.mxu0 0.0
      %638 = vmatprep.subr.mxu0 0.0
      %639 = vmatpush1.xpose.msra.mxu0 0.0
      %640 = vmatprep.subr.mxu0 0.0
      %641 = vmatpush1.xpose.msra.mxu0 0.0
      %642 = vmatprep.subr.mxu0 0.0
      %643 = vmatpush1.xpose.msra.mxu0 0.0
      %644 = vmatprep.subr.mxu0 0.0
      %645 = vmatpush1.xpose.msra.mxu0 0.0
      %646 = vmatprep.subr.mxu0 0.0
      %647 = vmatpush1.xpose.msra.mxu0 0.0
      %648 = vmatprep.subr.mxu0 0.0
      %649 = vmatpush1.xpose.msra.mxu0 0.0
      %650 = vmatprep.subr.mxu0 0.0
      %651 = vmatpush1.xpose.msra.mxu0 0.0
      %652 = vmatprep.subr.mxu0 0.0
      %653 = vmatpush1.xpose.msra.mxu0 0.0
      %654 = vmatprep.subr.mxu0 0.0
      %655 = vmatpush1.xpose.msra.mxu0 0.0
      %656 = vmatprep.mubr.f32.mxu0 0.0
      %657 = vmatmul.mubr.f32.gmra.mrb[0].mxu0 %v439
      %v658 = vpop.f32.mrb[0].mxu0
      %v659 = vadd.f32 0.0, %v658
      %v660 = vpop.f32.mrb[0].mxu0
      %661 = vdwg.mxu0
      %v662 = vld [vmem:[%s338] sm:$0xff]
      %v663 = vld [vmem:[%s343] sm:$0xff]
      %vm664 = vcmask 64512
      %v666 = vsel %vm664, %v663, 0
      %v669 = vsel %vm664, %v435, 0
      %671 = vmatprep.subr.mxu0 0.0
      %672 = vmatpush1.xpose.msra.mxu0 %v669
      %673 = vmatprep.subr.mxu0 0.0
      %674 = vmatpush1.xpose.msra.mxu0 0.0
      %675 = vmatprep.subr.mxu0 0.0
      %676 = vmatpush1.xpose.msra.mxu0 0.0
      %677 = vmatprep.subr.mxu0 0.0
      %678 = vmatpush1.xpose.msra.mxu0 0.0
      %679 = vmatprep.subr.mxu0 0.0
      %680 = vmatpush1.xpose.msra.mxu0 0.0
      %681 = vmatprep.subr.mxu0 0.0
      %682 = vmatpush1.xpose.msra.mxu0 0.0
      %683 = vmatprep.subr.mxu0 0.0
      %684 = vmatpush1.xpose.msra.mxu0 0.0
      %685 = vmatprep.subr.mxu0 0.0
      %686 = vmatpush1.xpose.msra.mxu0 0.0
      %687 = vmatprep.subr.mxu0 0.0
      %688 = vmatpush1.xpose.msra.mxu0 0.0
      %689 = vmatprep.subr.mxu0 0.0
      %690 = vmatpush1.xpose.msra.mxu0 0.0
      %691 = vmatprep.subr.mxu0 0.0
      %692 = vmatpush1.xpose.msra.mxu0 0.0
      %693 = vmatprep.subr.mxu0 0.0
      %694 = vmatpush1.xpose.msra.mxu0 0.0
      %695 = vmatprep.subr.mxu0 0.0
      %696 = vmatpush1.xpose.msra.mxu0 0.0
      %697 = vmatprep.subr.mxu0 0.0
      %698 = vmatpush1.xpose.msra.mxu0 0.0
      %699 = vmatprep.subr.mxu0 0.0
      %700 = vmatpush1.xpose.msra.mxu0 0.0
      %701 = vmatprep.subr.mxu0 0.0
      %702 = vmatpush1.xpose.msra.mxu0 0.0
      %703 = vmatprep.subr.mxu0 0.0
      %704 = vmatpush1.xpose.msra.mxu0 0.0
      %705 = vmatprep.subr.mxu0 0.0
      %706 = vmatpush1.xpose.msra.mxu0 0.0
      %707 = vmatprep.subr.mxu0 0.0
      %708 = vmatpush1.xpose.msra.mxu0 0.0
      %709 = vmatprep.subr.mxu0 0.0
      %710 = vmatpush1.xpose.msra.mxu0 0.0
      %711 = vmatprep.subr.mxu0 0.0
      %712 = vmatpush1.xpose.msra.mxu0 0.0
      %713 = vmatprep.subr.mxu0 0.0
      %714 = vmatpush1.xpose.msra.mxu0 0.0
      %715 = vmatprep.subr.mxu0 0.0
      %716 = vmatpush1.xpose.msra.mxu0 0.0
      %717 = vmatprep.subr.mxu0 0.0
      %718 = vmatpush1.xpose.msra.mxu0 0.0
      %719 = vmatprep.subr.mxu0 0.0
      %720 = vmatpush1.xpose.msra.mxu0 0.0
      %721 = vmatprep.subr.mxu0 0.0
      %722 = vmatpush1.xpose.msra.mxu0 0.0
      %723 = vmatprep.subr.mxu0 0.0
      %724 = vmatpush1.xpose.msra.mxu0 0.0
      %725 = vmatprep.subr.mxu0 0.0
      %726 = vmatpush1.xpose.msra.mxu0 0.0
      %727 = vmatprep.subr.mxu0 0.0
      %728 = vmatpush1.xpose.msra.mxu0 0.0
      %729 = vmatprep.subr.mxu0 0.0
      %730 = vmatpush1.xpose.msra.mxu0 0.0
      %731 = vmatprep.subr.mxu0 0.0
      %732 = vmatpush1.xpose.msra.mxu0 0.0
      %733 = vmatprep.subr.mxu0 0.0
      %734 = vmatpush1.xpose.msra.mxu0 0.0
      %735 = vmatprep.mubr.f32.mxu0 0.0
      %736 = vmatmul.mubr.f32.gmra.mrb[0].mxu0 %v666
      %v737 = vpop.f32.mrb[0].mxu0
      %v738 = vadd.f32 0.0, %v737
      %v739 = vpop.f32.mrb[0].mxu0
      %740 = vdwg.mxu0
      %v741 = vmul.f32 %v738, 0.35355338
      %v742 = vsel %vm664, %v741, -inf
      %743 = vmax.xlane.f32.xlu0 %v742
      %v744 = vpop.xlane.xlu0 %743
      %v745 = vsub.f32 %v741, %v744
      %v746 = vmul.f32 %v745, 1.442695
      %v747 = vpow.pop %v746
      %v748 = vsel %vm664, %v747, 0.0
      %749 = vadd.xlane.f32.xlu0 %v748
      %v750 = vpop.xlane.xlu0 %749
      %v751 = vrcp.pop %v750
      %v752 = vstv %s356
      %v753 = vmul.f32 %v752, %v751
      %v754 = vmul.f32 %v747, %v753
      %v756 = vsel %vm664, %v754, 0
      %758 = vmatprep.subr.mxu0 0.0
      %759 = vmatpush1.msra.mxu0 %v511
      %760 = vmatprep.subr.mxu0 0.0
      %761 = vmatpush1.msra.mxu0 0.0
      %762 = vmatprep.subr.mxu0 0.0
      %763 = vmatpush1.msra.mxu0 0.0
      %764 = vmatprep.subr.mxu0 0.0
      %765 = vmatpush1.msra.mxu0 0.0
      %766 = vmatprep.subr.mxu0 0.0
      %767 = vmatpush1.msra.mxu0 0.0
      %768 = vmatprep.subr.mxu0 0.0
      %769 = vmatpush1.msra.mxu0 0.0
      %770 = vmatprep.subr.mxu0 0.0
      %771 = vmatpush1.msra.mxu0 0.0
      %772 = vmatprep.subr.mxu0 0.0
      %773 = vmatpush1.msra.mxu0 0.0
      %774 = vmatprep.subr.mxu0 0.0
      %775 = vmatpush1.msra.mxu0 0.0
      %776 = vmatprep.subr.mxu0 0.0
      %777 = vmatpush1.msra.mxu0 0.0
      %778 = vmatprep.subr.mxu0 0.0
      %779 = vmatpush1.msra.mxu0 0.0
      %780 = vmatprep.subr.mxu0 0.0
      %781 = vmatpush1.msra.mxu0 0.0
      %782 = vmatprep.subr.mxu0 0.0
      %783 = vmatpush1.msra.mxu0 0.0
      %784 = vmatprep.subr.mxu0 0.0
      %785 = vmatpush1.msra.mxu0 0.0
      %786 = vmatprep.subr.mxu0 0.0
      %787 = vmatpush1.msra.mxu0 0.0
      %788 = vmatprep.subr.mxu0 0.0
      %789 = vmatpush1.msra.mxu0 0.0
      %790 = vmatprep.subr.mxu0 0.0
      %791 = vmatpush1.msra.mxu0 0.0
      %792 = vmatprep.subr.mxu0 0.0
      %793 = vmatpush1.msra.mxu0 0.0
      %794 = vmatprep.subr.mxu0 0.0
      %795 = vmatpush1.msra.mxu0 0.0
      %796 = vmatprep.subr.mxu0 0.0
      %797 = vmatpush1.msra.mxu0 0.0
      %798 = vmatprep.subr.mxu0 0.0
      %799 = vmatpush1.msra.mxu0 0.0
      %800 = vmatprep.subr.mxu0 0.0
      %801 = vmatpush1.msra.mxu0 0.0
      %802 = vmatprep.subr.mxu0 0.0
      %803 = vmatpush1.msra.mxu0 0.0
      %804 = vmatprep.subr.mxu0 0.0
      %805 = vmatpush1.msra.mxu0 0.0
      %806 = vmatprep.subr.mxu0 0.0
      %807 = vmatpush1.msra.mxu0 0.0
      %808 = vmatprep.subr.mxu0 0.0
      %809 = vmatpush1.msra.mxu0 0.0
      %810 = vmatprep.subr.mxu0 0.0
      %811 = vmatpush1.msra.mxu0 0.0
      %812 = vmatprep.subr.mxu0 0.0
      %813 = vmatpush1.msra.mxu0 0.0
      %814 = vmatprep.subr.mxu0 0.0
      %815 = vmatpush1.msra.mxu0 0.0
      %816 = vmatprep.subr.mxu0 0.0
      %817 = vmatpush1.msra.mxu0 0.0
      %818 = vmatprep.subr.mxu0 0.0
      %819 = vmatpush1.msra.mxu0 0.0
      %820 = vmatprep.subr.mxu0 0.0
      %821 = vmatpush1.msra.mxu0 0.0
      %822 = vmatprep.mubr.f32.mxu0 0.0
      %823 = vmatmul.mubr.f32.gmra.mrb[0].mxu0 %v756
      %v824 = vpop.f32.mrb[0].mxu0
      %v825 = vadd.f32 0.0, %v824
      %v826 = vpop.f32.mrb[0].mxu0
      %827 = vdwg.mxu0
      %v828 = vld [vmem:[%s7] sm:$0xff]
      %v829 = vld [vmem:[%s7 + $0x8] sm:$0xff]
      %v830 = vld [vmem:[%s7 + $0x10] sm:$0xff]
      %v831 = vld [vmem:[%s7 + $0x18] sm:$0xff]
      %v833 = vsel %vm664, %v825, 0
      %v836 = vsel %vm664, %v828, 0
      %v839 = vsel %vm664, %v829, 0
      %v842 = vsel %vm664, %v830, 0
      %v845 = vsel %vm664, %v831, 0
      %847 = vmatprep.subr.mxu0 0.0
      %848 = vmatpush1.xpose.msra.mxu0 %v836
      %849 = vmatprep.subr.mxu0 0.0
      %850 = vmatpush1.xpose.msra.mxu0 %v839
      %851 = vmatprep.subr.mxu0 0.0
      %852 = vmatpush1.xpose.msra.mxu0 %v842
      %853 = vmatprep.subr.mxu0 0.0
      %854 = vmatpush1.xpose.msra.mxu0 %v845
      %855 = vmatprep.subr.mxu0 0.0
      %856 = vmatpush1.xpose.msra.mxu0 0.0
      %857 = vmatprep.subr.mxu0 0.0
      %858 = vmatpush1.xpose.msra.mxu0 0.0
      %859 = vmatprep.subr.mxu0 0.0
      %860 = vmatpush1.xpose.msra.mxu0 0.0
      %861 = vmatprep.subr.mxu0 0.0
      %862 = vmatpush1.xpose.msra.mxu0 0.0
      %863 = vmatprep.subr.mxu0 0.0
      %864 = vmatpush1.xpose.msra.mxu0 0.0
      %865 = vmatprep.subr.mxu0 0.0
      %866 = vmatpush1.xpose.msra.mxu0 0.0
      %867 = vmatprep.subr.mxu0 0.0
      %868 = vmatpush1.xpose.msra.mxu0 0.0
      %869 = vmatprep.subr.mxu0 0.0
      %870 = vmatpush1.xpose.msra.mxu0 0.0
      %871 = vmatprep.subr.mxu0 0.0
      %872 = vmatpush1.xpose.msra.mxu0 0.0
      %873 = vmatprep.subr.mxu0 0.0
      %874 = vmatpush1.xpose.msra.mxu0 0.0
      %875 = vmatprep.subr.mxu0 0.0
      %876 = vmatpush1.xpose.msra.mxu0 0.0
      %877 = vmatprep.subr.mxu0 0.0
      %878 = vmatpush1.xpose.msra.mxu0 0.0
      %879 = vmatprep.subr.mxu0 0.0
      %880 = vmatpush1.xpose.msra.mxu0 0.0
      %881 = vmatprep.subr.mxu0 0.0
      %882 = vmatpush1.xpose.msra.mxu0 0.0
      %883 = vmatprep.subr.mxu0 0.0
      %884 = vmatpush1.xpose.msra.mxu0 0.0
      %885 = vmatprep.subr.mxu0 0.0
      %886 = vmatpush1.xpose.msra.mxu0 0.0
      %887 = vmatprep.subr.mxu0 0.0
      %888 = vmatpush1.xpose.msra.mxu0 0.0
      %889 = vmatprep.subr.mxu0 0.0
      %890 = vmatpush1.xpose.msra.mxu0 0.0
      %891 = vmatprep.subr.mxu0 0.0
      %892 = vmatpush1.xpose.msra.mxu0 0.0
      %893 = vmatprep.subr.mxu0 0.0
      %894 = vmatpush1.xpose.msra.mxu0 0.0
      %895 = vmatprep.subr.mxu0 0.0
      %896 = vmatpush1.xpose.msra.mxu0 0.0
      %897 = vmatprep.subr.mxu0 0.0
      %898 = vmatpush1.xpose.msra.mxu0 0.0
      %899 = vmatprep.subr.mxu0 0.0
      %900 = vmatpush1.xpose.msra.mxu0 0.0
      %901 = vmatprep.subr.mxu0 0.0
      %902 = vmatpush1.xpose.msra.mxu0 0.0
      %903 = vmatprep.subr.mxu0 0.0
      %904 = vmatpush1.xpose.msra.mxu0 0.0
      %905 = vmatprep.subr.mxu0 0.0
      %906 = vmatpush1.xpose.msra.mxu0 0.0
      %907 = vmatprep.subr.mxu0 0.0
      %908 = vmatpush1.xpose.msra.mxu0 0.0
      %909 = vmatprep.subr.mxu0 0.0
      %910 = vmatpush1.xpose.msra.mxu0 0.0
      %911 = vmatprep.mubr.f32.mxu0 0.0
      %912 = vmatmul.mubr.f32.gmra.mrb[0].mxu0 %v833
      %v913 = vpop.f32.mrb[0].mxu0
      %v914 = vadd.f32 0.0, %v913
      %v915 = vpop.f32.mrb[0].mxu0
      %916 = vdwg.mxu0
      %v917 = vadd.f32 %v662, %v914
      %s918 = scalar_lea.vmem %s343, 8
      %v919 = vld [vmem:[%s918] sm:$0xff]
      %v921 = vsel %vm664, %v919, 0
      %923 = vmatprep.subr.mxu0 0.0
      %924 = vmatpush1.xpose.msra.mxu0 %v669
      %925 = vmatprep.subr.mxu0 0.0
      %926 = vmatpush1.xpose.msra.mxu0 0.0
      %927 = vmatprep.subr.mxu0 0.0
      %928 = vmatpush1.xpose.msra.mxu0 0.0
      %929 = vmatprep.subr.mxu0 0.0
      %930 = vmatpush1.xpose.msra.mxu0 0.0
      %931 = vmatprep.subr.mxu0 0.0
      %932 = vmatpush1.xpose.msra.mxu0 0.0
      %933 = vmatprep.subr.mxu0 0.0
      %934 = vmatpush1.xpose.msra.mxu0 0.0
      %935 = vmatprep.subr.mxu0 0.0
      %936 = vmatpush1.xpose.msra.mxu0 0.0
      %937 = vmatprep.subr.mxu0 0.0
      %938 = vmatpush1.xpose.msra.mxu0 0.0
      %939 = vmatprep.subr.mxu0 0.0
      %940 = vmatpush1.xpose.msra.mxu0 0.0
      %941 = vmatprep.subr.mxu0 0.0
      %942 = vmatpush1.xpose.msra.mxu0 0.0
      %943 = vmatprep.subr.mxu0 0.0
      %944 = vmatpush1.xpose.msra.mxu0 0.0
      %945 = vmatprep.subr.mxu0 0.0
      %946 = vmatpush1.xpose.msra.mxu0 0.0
      %947 = vmatprep.subr.mxu0 0.0
      %948 = vmatpush1.xpose.msra.mxu0 0.0
      %949 = vmatprep.subr.mxu0 0.0
      %950 = vmatpush1.xpose.msra.mxu0 0.0
      %951 = vmatprep.subr.mxu0 0.0
      %952 = vmatpush1.xpose.msra.mxu0 0.0
      %953 = vmatprep.subr.mxu0 0.0
      %954 = vmatpush1.xpose.msra.mxu0 0.0
      %955 = vmatprep.subr.mxu0 0.0
      %956 = vmatpush1.xpose.msra.mxu0 0.0
      %957 = vmatprep.subr.mxu0 0.0
      %958 = vmatpush1.xpose.msra.mxu0 0.0
      %959 = vmatprep.subr.mxu0 0.0
      %960 = vmatpush1.xpose.msra.mxu0 0.0
      %961 = vmatprep.subr.mxu0 0.0
      %962 = vmatpush1.xpose.msra.mxu0 0.0
      %963 = vmatprep.subr.mxu0 0.0
      %964 = vmatpush1.xpose.msra.mxu0 0.0
      %965 = vmatprep.subr.mxu0 0.0
      %966 = vmatpush1.xpose.msra.mxu0 0.0
      %967 = vmatprep.subr.mxu0 0.0
      %968 = vmatpush1.xpose.msra.mxu0 0.0
      %969 = vmatprep.subr.mxu0 0.0
      %970 = vmatpush1.xpose.msra.mxu0 0.0
      %971 = vmatprep.subr.mxu0 0.0
      %972 = vmatpush1.xpose.msra.mxu0 0.0
      %973 = vmatprep.subr.mxu0 0.0
      %974 = vmatpush1.xpose.msra.mxu0 0.0
      %975 = vmatprep.subr.mxu0 0.0
      %976 = vmatpush1.xpose.msra.mxu0 0.0
      %977 = vmatprep.subr.mxu0 0.0
      %978 = vmatpush1.xpose.msra.mxu0 0.0
      %979 = vmatprep.subr.mxu0 0.0
      %980 = vmatpush1.xpose.msra.mxu0 0.0
      %981 = vmatprep.subr.mxu0 0.0
      %982 = vmatpush1.xpose.msra.mxu0 0.0
      %983 = vmatprep.subr.mxu0 0.0
      %984 = vmatpush1.xpose.msra.mxu0 0.0
      %985 = vmatprep.subr.mxu0 0.0
      %986 = vmatpush1.xpose.msra.mxu0 0.0
      %987 = vmatprep.mubr.f32.mxu0 0.0
      %988 = vmatmul.mubr.f32.gmra.mrb[0].mxu0 %v921
      %v989 = vpop.f32.mrb[0].mxu0
      %v990 = vadd.f32 0.0, %v989
      %v991 = vpop.f32.mrb[0].mxu0
      %992 = vdwg.mxu0
      %v993 = vmul.f32 %v990, 0.35355338
      %v994 = vsel %vm664, %v993, -inf
      %995 = vmax.xlane.f32.xlu0 %v994
      %v996 = vpop.xlane.xlu0 %995
      %v997 = vsub.f32 %v993, %v996
      %v998 = vmul.f32 %v997, 1.442695
      %v999 = vpow.pop %v998
      %v1000 = vsel %vm664, %v999, 0.0
      %1001 = vadd.xlane.f32.xlu0 %v1000
      %v1002 = vpop.xlane.xlu0 %1001
      %v1003 = vrcp.pop %v1002
      %v1004 = vmul.f32 %v752, %v1003
      %v1005 = vmul.f32 %v999, %v1004
      %v1007 = vsel %vm664, %v1005, 0
      %1009 = vmatprep.subr.mxu0 0.0
      %1010 = vmatpush1.msra.mxu0 %v511
      %1011 = vmatprep.subr.mxu0 0.0
      %1012 = vmatpush1.msra.mxu0 0.0
      %1013 = vmatprep.subr.mxu0 0.0
      %1014 = vmatpush1.msra.mxu0 0.0
      %1015 = vmatprep.subr.mxu0 0.0
      %1016 = vmatpush1.msra.mxu0 0.0
      %1017 = vmatprep.subr.mxu0 0.0
      %1018 = vmatpush1.msra.mxu0 0.0
      %1019 = vmatprep.subr.mxu0 0.0
      %1020 = vmatpush1.msra.mxu0 0.0
      %1021 = vmatprep.subr.mxu0 0.0
      %1022 = vmatpush1.msra.mxu0 0.0
      %1023 = vmatprep.subr.mxu0 0.0
      %1024 = vmatpush1.msra.mxu0 0.0
      %1025 = vmatprep.subr.mxu0 0.0
      %1026 = vmatpush1.msra.mxu0 0.0
      %1027 = vmatprep.subr.mxu0 0.0
      %1028 = vmatpush1.msra.mxu0 0.0
      %1029 = vmatprep.subr.mxu0 0.0
      %1030 = vmatpush1.msra.mxu0 0.0
      %1031 = vmatprep.subr.mxu0 0.0
      %1032 = vmatpush1.msra.mxu0 0.0
      %1033 = vmatprep.subr.mxu0 0.0
      %1034 = vmatpush1.msra.mxu0 0.0
      %1035 = vmatprep.subr.mxu0 0.0
      %1036 = vmatpush1.msra.mxu0 0.0
      %1037 = vmatprep.subr.mxu0 0.0
      %1038 = vmatpush1.msra.mxu0 0.0
      %1039 = vmatprep.subr.mxu0 0.0
      %1040 = vmatpush1.msra.mxu0 0.0
      %1041 = vmatprep.subr.mxu0 0.0
      %1042 = vmatpush1.msra.mxu0 0.0
      %1043 = vmatprep.subr.mxu0 0.0
      %1044 = vmatpush1.msra.mxu0 0.0
      %1045 = vmatprep.subr.mxu0 0.0
      %1046 = vmatpush1.msra.mxu0 0.0
      %1047 = vmatprep.subr.mxu0 0.0
      %1048 = vmatpush1.msra.mxu0 0.0
      %1049 = vmatprep.subr.mxu0 0.0
      %1050 = vmatpush1.msra.mxu0 0.0
      %1051 = vmatprep.subr.mxu0 0.0
      %1052 = vmatpush1.msra.mxu0 0.0
      %1053 = vmatprep.subr.mxu0 0.0
      %1054 = vmatpush1.msra.mxu0 0.0
      %1055 = vmatprep.subr.mxu0 0.0
      %1056 = vmatpush1.msra.mxu0 0.0
      %1057 = vmatprep.subr.mxu0 0.0
      %1058 = vmatpush1.msra.mxu0 0.0
      %1059 = vmatprep.subr.mxu0 0.0
      %1060 = vmatpush1.msra.mxu0 0.0
      %1061 = vmatprep.subr.mxu0 0.0
      %1062 = vmatpush1.msra.mxu0 0.0
      %1063 = vmatprep.subr.mxu0 0.0
      %1064 = vmatpush1.msra.mxu0 0.0
      %1065 = vmatprep.subr.mxu0 0.0
      %1066 = vmatpush1.msra.mxu0 0.0
      %1067 = vmatprep.subr.mxu0 0.0
      %1068 = vmatpush1.msra.mxu0 0.0
      %1069 = vmatprep.subr.mxu0 0.0
      %1070 = vmatpush1.msra.mxu0 0.0
      %1071 = vmatprep.subr.mxu0 0.0
      %1072 = vmatpush1.msra.mxu0 0.0
      %1073 = vmatprep.mubr.f32.mxu0 0.0
      %1074 = vmatmul.mubr.f32.gmra.mrb[0].mxu0 %v1007
      %v1075 = vpop.f32.mrb[0].mxu0
      %v1076 = vadd.f32 0.0, %v1075
      %v1077 = vpop.f32.mrb[0].mxu0
      %1078 = vdwg.mxu0
      %1079 = vrot.lane.b32.xlu0 %v828, 120
      %v1080 = vpop.permute.xlu0 %1079
      %1081 = vrot.lane.b32.xlu0 %v829, 120
      %v1082 = vpop.permute.xlu0 %1081
      %1083 = vrot.lane.b32.xlu0 %v830, 120
      %v1084 = vpop.permute.xlu0 %1083
      %1085 = vrot.lane.b32.xlu0 %v831, 120
      %v1086 = vpop.permute.xlu0 %1085
      %v1088 = vsel %vm664, %v1076, 0
      %v1090 = vsel %vm664, %v1080, 0
      %v1092 = vsel %vm664, %v1082, 0
      %v1094 = vsel %vm664, %v1084, 0
      %v1096 = vsel %vm664, %v1086, 0
      %1098 = vmatprep.subr.mxu0 0.0
      %1099 = vmatpush1.xpose.msra.mxu0 %v1090
      %1100 = vmatprep.subr.mxu0 0.0
      %1101 = vmatpush1.xpose.msra.mxu0 %v1092
      %1102 = vmatprep.subr.mxu0 0.0
      %1103 = vmatpush1.xpose.msra.mxu0 %v1094
      %1104 = vmatprep.subr.mxu0 0.0
      %1105 = vmatpush1.xpose.msra.mxu0 %v1096
      %1106 = vmatprep.subr.mxu0 0.0
      %1107 = vmatpush1.xpose.msra.mxu0 0.0
      %1108 = vmatprep.subr.mxu0 0.0
      %1109 = vmatpush1.xpose.msra.mxu0 0.0
      %1110 = vmatprep.subr.mxu0 0.0
      %1111 = vmatpush1.xpose.msra.mxu0 0.0
      %1112 = vmatprep.subr.mxu0 0.0
      %1113 = vmatpush1.xpose.msra.mxu0 0.0
      %1114 = vmatprep.subr.mxu0 0.0
      %1115 = vmatpush1.xpose.msra.mxu0 0.0
      %1116 = vmatprep.subr.mxu0 0.0
      %1117 = vmatpush1.xpose.msra.mxu0 0.0
      %1118 = vmatprep.subr.mxu0 0.0
      %1119 = vmatpush1.xpose.msra.mxu0 0.0
      %1120 = vmatprep.subr.mxu0 0.0
      %1121 = vmatpush1.xpose.msra.mxu0 0.0
      %1122 = vmatprep.subr.mxu0 0.0
      %1123 = vmatpush1.xpose.msra.mxu0 0.0
      %1124 = vmatprep.subr.mxu0 0.0
      %1125 = vmatpush1.xpose.msra.mxu0 0.0
      %1126 = vmatprep.subr.mxu0 0.0
      %1127 = vmatpush1.xpose.msra.mxu0 0.0
      %1128 = vmatprep.subr.mxu0 0.0
      %1129 = vmatpush1.xpose.msra.mxu0 0.0
      %1130 = vmatprep.subr.mxu0 0.0
      %1131 = vmatpush1.xpose.msra.mxu0 0.0
      %1132 = vmatprep.subr.mxu0 0.0
      %1133 = vmatpush1.xpose.msra.mxu0 0.0
      %1134 = vmatprep.subr.mxu0 0.0
      %1135 = vmatpush1.xpose.msra.mxu0 0.0
      %1136 = vmatprep.subr.mxu0 0.0
      %1137 = vmatpush1.xpose.msra.mxu0 0.0
      %1138 = vmatprep.subr.mxu0 0.0
      %1139 = vmatpush1.xpose.msra.mxu0 0.0
      %1140 = vmatprep.subr.mxu0 0.0
      %1141 = vmatpush1.xpose.msra.mxu0 0.0
      %1142 = vmatprep.subr.mxu0 0.0
      %1143 = vmatpush1.xpose.msra.mxu0 0.0
      %1144 = vmatprep.subr.mxu0 0.0
      %1145 = vmatpush1.xpose.msra.mxu0 0.0
      %1146 = vmatprep.subr.mxu0 0.0
      %1147 = vmatpush1.xpose.msra.mxu0 0.0
      %1148 = vmatprep.subr.mxu0 0.0
      %1149 = vmatpush1.xpose.msra.mxu0 0.0
      %1150 = vmatprep.subr.mxu0 0.0
      %1151 = vmatpush1.xpose.msra.mxu0 0.0
      %1152 = vmatprep.subr.mxu0 0.0
      %1153 = vmatpush1.xpose.msra.mxu0 0.0
      %1154 = vmatprep.subr.mxu0 0.0
      %1155 = vmatpush1.xpose.msra.mxu0 0.0
      %1156 = vmatprep.subr.mxu0 0.0
      %1157 = vmatpush1.xpose.msra.mxu0 0.0
      %1158 = vmatprep.subr.mxu0 0.0
      %1159 = vmatpush1.xpose.msra.mxu0 0.0
      %1160 = vmatprep.subr.mxu0 0.0
      %1161 = vmatpush1.xpose.msra.mxu0 0.0
      %1162 = vmatprep.mubr.f32.mxu0 0.0
      %1163 = vmatmul.mubr.f32.gmra.mrb[0].mxu0 %v1088
      %v1164 = vpop.f32.mrb[0].mxu0
      %v1165 = vadd.f32 0.0, %v1164
      %v1166 = vpop.f32.mrb[0].mxu0
      %1167 = vdwg.mxu0
      %v1168 = vadd.f32 %v917, %v1165
      %s1169 = scalar_lea.vmem %s343, 16
      %v1170 = vld [vmem:[%s1169] sm:$0xff]
      %v1172 = vsel %vm664, %v1170, 0
      %v1175 = vsel %vm664, %v586, 0
      %1177 = vmatprep.subr.mxu0 0.0
      %1178 = vmatpush1.xpose.msra.mxu0 %v1175
      %1179 = vmatprep.subr.mxu0 0.0
      %1180 = vmatpush1.xpose.msra.mxu0 0.0
      %1181 = vmatprep.subr.mxu0 0.0
      %1182 = vmatpush1.xpose.msra.mxu0 0.0
      %1183 = vmatprep.subr.mxu0 0.0
      %1184 = vmatpush1.xpose.msra.mxu0 0.0
      %1185 = vmatprep.subr.mxu0 0.0
      %1186 = vmatpush1.xpose.msra.mxu0 0.0
      %1187 = vmatprep.subr.mxu0 0.0
      %1188 = vmatpush1.xpose.msra.mxu0 0.0
      %1189 = vmatprep.subr.mxu0 0.0
      %1190 = vmatpush1.xpose.msra.mxu0 0.0
      %1191 = vmatprep.subr.mxu0 0.0
      %1192 = vmatpush1.xpose.msra.mxu0 0.0
      %1193 = vmatprep.subr.mxu0 0.0
      %1194 = vmatpush1.xpose.msra.mxu0 0.0
      %1195 = vmatprep.subr.mxu0 0.0
      %1196 = vmatpush1.xpose.msra.mxu0 0.0
      %1197 = vmatprep.subr.mxu0 0.0
      %1198 = vmatpush1.xpose.msra.mxu0 0.0
      %1199 = vmatprep.subr.mxu0 0.0
      %1200 = vmatpush1.xpose.msra.mxu0 0.0
      %1201 = vmatprep.subr.mxu0 0.0
      %1202 = vmatpush1.xpose.msra.mxu0 0.0
      %1203 = vmatprep.subr.mxu0 0.0
      %1204 = vmatpush1.xpose.msra.mxu0 0.0
      %1205 = vmatprep.subr.mxu0 0.0
      %1206 = vmatpush1.xpose.msra.mxu0 0.0
      %1207 = vmatprep.subr.mxu0 0.0
      %1208 = vmatpush1.xpose.msra.mxu0 0.0
      %1209 = vmatprep.subr.mxu0 0.0
      %1210 = vmatpush1.xpose.msra.mxu0 0.0
      %1211 = vmatprep.subr.mxu0 0.0
      %1212 = vmatpush1.xpose.msra.mxu0 0.0
      %1213 = vmatprep.subr.mxu0 0.0
      %1214 = vmatpush1.xpose.msra.mxu0 0.0
      %1215 = vmatprep.subr.mxu0 0.0
      %1216 = vmatpush1.xpose.msra.mxu0 0.0
      %1217 = vmatprep.subr.mxu0 0.0
      %1218 = vmatpush1.xpose.msra.mxu0 0.0
      %1219 = vmatprep.subr.mxu0 0.0
      %1220 = vmatpush1.xpose.msra.mxu0 0.0
      %1221 = vmatprep.subr.mxu0 0.0
      %1222 = vmatpush1.xpose.msra.mxu0 0.0
      %1223 = vmatprep.subr.mxu0 0.0
      %1224 = vmatpush1.xpose.msra.mxu0 0.0
      %1225 = vmatprep.subr.mxu0 0.0
      %1226 = vmatpush1.xpose.msra.mxu0 0.0
      %1227 = vmatprep.subr.mxu0 0.0
      %1228 = vmatpush1.xpose.msra.mxu0 0.0
      %1229 = vmatprep.subr.mxu0 0.0
      %1230 = vmatpush1.xpose.msra.mxu0 0.0
      %1231 = vmatprep.subr.mxu0 0.0
      %1232 = vmatpush1.xpose.msra.mxu0 0.0
      %1233 = vmatprep.subr.mxu0 0.0
      %1234 = vmatpush1.xpose.msra.mxu0 0.0
      %1235 = vmatprep.subr.mxu0 0.0
      %1236 = vmatpush1.xpose.msra.mxu0 0.0
      %1237 = vmatprep.subr.mxu0 0.0
      %1238 = vmatpush1.xpose.msra.mxu0 0.0
      %1239 = vmatprep.subr.mxu0 0.0
      %1240 = vmatpush1.xpose.msra.mxu0 0.0
      %1241 = vmatprep.mubr.f32.mxu0 0.0
      %1242 = vmatmul.mubr.f32.gmra.mrb[0].mxu0 %v1172
      %v1243 = vpop.f32.mrb[0].mxu0
      %v1244 = vadd.f32 0.0, %v1243
      %v1245 = vpop.f32.mrb[0].mxu0
      %1246 = vdwg.mxu0
      %v1247 = vmul.f32 %v1244, 0.35355338
      %v1248 = vsel %vm664, %v1247, -inf
      %1249 = vmax.xlane.f32.xlu0 %v1248
      %v1250 = vpop.xlane.xlu0 %1249
      %v1251 = vsub.f32 %v1247, %v1250
      %v1252 = vmul.f32 %v1251, 1.442695
      %v1253 = vpow.pop %v1252
      %v1254 = vsel %vm664, %v1253, 0.0
      %1255 = vadd.xlane.f32.xlu0 %v1254
      %v1256 = vpop.xlane.xlu0 %1255
      %v1257 = vrcp.pop %v1256
      %v1258 = vmul.f32 %v752, %v1257
      %v1259 = vmul.f32 %v1253, %v1258
      %v1261 = vsel %vm664, %v1259, 0
      %1263 = vmatprep.subr.mxu0 0.0
      %1264 = vmatpush1.msra.mxu0 %v659
      %1265 = vmatprep.subr.mxu0 0.0
      %1266 = vmatpush1.msra.mxu0 0.0
      %1267 = vmatprep.subr.mxu0 0.0
      %1268 = vmatpush1.msra.mxu0 0.0
      %1269 = vmatprep.subr.mxu0 0.0
      %1270 = vmatpush1.msra.mxu0 0.0
      %1271 = vmatprep.subr.mxu0 0.0
      %1272 = vmatpush1.msra.mxu0 0.0
      %1273 = vmatprep.subr.mxu0 0.0
      %1274 = vmatpush1.msra.mxu0 0.0
      %1275 = vmatprep.subr.mxu0 0.0
      %1276 = vmatpush1.msra.mxu0 0.0
      %1277 = vmatprep.subr.mxu0 0.0
      %1278 = vmatpush1.msra.mxu0 0.0
      %1279 = vmatprep.subr.mxu0 0.0
      %1280 = vmatpush1.msra.mxu0 0.0
      %1281 = vmatprep.subr.mxu0 0.0
      %1282 = vmatpush1.msra.mxu0 0.0
      %1283 = vmatprep.subr.mxu0 0.0
      %1284 = vmatpush1.msra.mxu0 0.0
      %1285 = vmatprep.subr.mxu0 0.0
      %1286 = vmatpush1.msra.mxu0 0.0
      %1287 = vmatprep.subr.mxu0 0.0
      %1288 = vmatpush1.msra.mxu0 0.0
      %1289 = vmatprep.subr.mxu0 0.0
      %1290 = vmatpush1.msra.mxu0 0.0
      %1291 = vmatprep.subr.mxu0 0.0
      %1292 = vmatpush1.msra.mxu0 0.0
      %1293 = vmatprep.subr.mxu0 0.0
      %1294 = vmatpush1.msra.mxu0 0.0
      %1295 = vmatprep.subr.mxu0 0.0
      %1296 = vmatpush1.msra.mxu0 0.0
      %1297 = vmatprep.subr.mxu0 0.0
      %1298 = vmatpush1.msra.mxu0 0.0
      %1299 = vmatprep.subr.mxu0 0.0
      %1300 = vmatpush1.msra.mxu0 0.0
      %1301 = vmatprep.subr.mxu0 0.0
      %1302 = vmatpush1.msra.mxu0 0.0
      %1303 = vmatprep.subr.mxu0 0.0
      %1304 = vmatpush1.msra.mxu0 0.0
      %1305 = vmatprep.subr.mxu0 0.0
      %1306 = vmatpush1.msra.mxu0 0.0
      %1307 = vmatprep.subr.mxu0 0.0
      %1308 = vmatpush1.msra.mxu0 0.0
      %1309 = vmatprep.subr.mxu0 0.0
      %1310 = vmatpush1.msra.mxu0 0.0
      %1311 = vmatprep.subr.mxu0 0.0
      %1312 = vmatpush1.msra.mxu0 0.0
      %1313 = vmatprep.subr.mxu0 0.0
      %1314 = vmatpush1.msra.mxu0 0.0
      %1315 = vmatprep.subr.mxu0 0.0
      %1316 = vmatpush1.msra.mxu0 0.0
      %1317 = vmatprep.subr.mxu0 0.0
      %1318 = vmatpush1.msra.mxu0 0.0
      %1319 = vmatprep.subr.mxu0 0.0
      %1320 = vmatpush1.msra.mxu0 0.0
      %1321 = vmatprep.subr.mxu0 0.0
      %1322 = vmatpush1.msra.mxu0 0.0
      %1323 = vmatprep.subr.mxu0 0.0
      %1324 = vmatpush1.msra.mxu0 0.0
      %1325 = vmatprep.subr.mxu0 0.0
      %1326 = vmatpush1.msra.mxu0 0.0
      %1327 = vmatprep.mubr.f32.mxu0 0.0
      %1328 = vmatmul.mubr.f32.gmra.mrb[0].mxu0 %v1261
      %v1329 = vpop.f32.mrb[0].mxu0
      %v1330 = vadd.f32 0.0, %v1329
      %v1331 = vpop.f32.mrb[0].mxu0
      %1332 = vdwg.mxu0
      %1333 = vrot.lane.b32.xlu0 %v828, 112
      %v1334 = vpop.permute.xlu0 %1333
      %1335 = vrot.lane.b32.xlu0 %v829, 112
      %v1336 = vpop.permute.xlu0 %1335
      %1337 = vrot.lane.b32.xlu0 %v830, 112
      %v1338 = vpop.permute.xlu0 %1337
      %1339 = vrot.lane.b32.xlu0 %v831, 112
      %v1340 = vpop.permute.xlu0 %1339
      %v1342 = vsel %vm664, %v1330, 0
      %v1344 = vsel %vm664, %v1334, 0
      %v1346 = vsel %vm664, %v1336, 0
      %v1348 = vsel %vm664, %v1338, 0
      %v1350 = vsel %vm664, %v1340, 0
      %1352 = vmatprep.subr.mxu0 0.0
      %1353 = vmatpush1.xpose.msra.mxu0 %v1344
      %1354 = vmatprep.subr.mxu0 0.0
      %1355 = vmatpush1.xpose.msra.mxu0 %v1346
      %1356 = vmatprep.subr.mxu0 0.0
      %1357 = vmatpush1.xpose.msra.mxu0 %v1348
      %1358 = vmatprep.subr.mxu0 0.0
      %1359 = vmatpush1.xpose.msra.mxu0 %v1350
      %1360 = vmatprep.subr.mxu0 0.0
      %1361 = vmatpush1.xpose.msra.mxu0 0.0
      %1362 = vmatprep.subr.mxu0 0.0
      %1363 = vmatpush1.xpose.msra.mxu0 0.0
      %1364 = vmatprep.subr.mxu0 0.0
      %1365 = vmatpush1.xpose.msra.mxu0 0.0
      %1366 = vmatprep.subr.mxu0 0.0
      %1367 = vmatpush1.xpose.msra.mxu0 0.0
      %1368 = vmatprep.subr.mxu0 0.0
      %1369 = vmatpush1.xpose.msra.mxu0 0.0
      %1370 = vmatprep.subr.mxu0 0.0
      %1371 = vmatpush1.xpose.msra.mxu0 0.0
      %1372 = vmatprep.subr.mxu0 0.0
      %1373 = vmatpush1.xpose.msra.mxu0 0.0
      %1374 = vmatprep.subr.mxu0 0.0
      %1375 = vmatpush1.xpose.msra.mxu0 0.0
      %1376 = vmatprep.subr.mxu0 0.0
      %1377 = vmatpush1.xpose.msra.mxu0 0.0
      %1378 = vmatprep.subr.mxu0 0.0
      %1379 = vmatpush1.xpose.msra.mxu0 0.0
      %1380 = vmatprep.subr.mxu0 0.0
      %1381 = vmatpush1.xpose.msra.mxu0 0.0
      %1382 = vmatprep.subr.mxu0 0.0
      %1383 = vmatpush1.xpose.msra.mxu0 0.0
      %1384 = vmatprep.subr.mxu0 0.0
      %1385 = vmatpush1.xpose.msra.mxu0 0.0
      %1386 = vmatprep.subr.mxu0 0.0
      %1387 = vmatpush1.xpose.msra.mxu0 0.0
      %1388 = vmatprep.subr.mxu0 0.0
      %1389 = vmatpush1.xpose.msra.mxu0 0.0
      %1390 = vmatprep.subr.mxu0 0.0
      %1391 = vmatpush1.xpose.msra.mxu0 0.0
      %1392 = vmatprep.subr.mxu0 0.0
      %1393 = vmatpush1.xpose.msra.mxu0 0.0
      %1394 = vmatprep.subr.mxu0 0.0
      %1395 = vmatpush1.xpose.msra.mxu0 0.0
      %1396 = vmatprep.subr.mxu0 0.0
      %1397 = vmatpush1.xpose.msra.mxu0 0.0
      %1398 = vmatprep.subr.mxu0 0.0
      %1399 = vmatpush1.xpose.msra.mxu0 0.0
      %1400 = vmatprep.subr.mxu0 0.0
      %1401 = vmatpush1.xpose.msra.mxu0 0.0
      %1402 = vmatprep.subr.mxu0 0.0
      %1403 = vmatpush1.xpose.msra.mxu0 0.0
      %1404 = vmatprep.subr.mxu0 0.0
      %1405 = vmatpush1.xpose.msra.mxu0 0.0
      %1406 = vmatprep.subr.mxu0 0.0
      %1407 = vmatpush1.xpose.msra.mxu0 0.0
      %1408 = vmatprep.subr.mxu0 0.0
      %1409 = vmatpush1.xpose.msra.mxu0 0.0
      %1410 = vmatprep.subr.mxu0 0.0
      %1411 = vmatpush1.xpose.msra.mxu0 0.0
      %1412 = vmatprep.subr.mxu0 0.0
      %1413 = vmatpush1.xpose.msra.mxu0 0.0
      %1414 = vmatprep.subr.mxu0 0.0
      %1415 = vmatpush1.xpose.msra.mxu0 0.0
      %1416 = vmatprep.mubr.f32.mxu0 0.0
      %1417 = vmatmul.mubr.f32.gmra.mrb[0].mxu0 %v1342
      %v1418 = vpop.f32.mrb[0].mxu0
      %v1419 = vadd.f32 0.0, %v1418
      %v1420 = vpop.f32.mrb[0].mxu0
      %1421 = vdwg.mxu0
      %v1422 = vadd.f32 %v1168, %v1419
      %s1423 = scalar_lea.vmem %s343, 24
      %v1424 = vld [vmem:[%s1423] sm:$0xff]
      %v1426 = vsel %vm664, %v1424, 0
      %1428 = vmatprep.subr.mxu0 0.0
      %1429 = vmatpush1.xpose.msra.mxu0 %v1175
      %1430 = vmatprep.subr.mxu0 0.0
      %1431 = vmatpush1.xpose.msra.mxu0 0.0
      %1432 = vmatprep.subr.mxu0 0.0
      %1433 = vmatpush1.xpose.msra.mxu0 0.0
      %1434 = vmatprep.subr.mxu0 0.0
      %1435 = vmatpush1.xpose.msra.mxu0 0.0
      %1436 = vmatprep.subr.mxu0 0.0
      %1437 = vmatpush1.xpose.msra.mxu0 0.0
      %1438 = vmatprep.subr.mxu0 0.0
      %1439 = vmatpush1.xpose.msra.mxu0 0.0
      %1440 = vmatprep.subr.mxu0 0.0
      %1441 = vmatpush1.xpose.msra.mxu0 0.0
      %1442 = vmatprep.subr.mxu0 0.0
      %1443 = vmatpush1.xpose.msra.mxu0 0.0
      %1444 = vmatprep.subr.mxu0 0.0
      %1445 = vmatpush1.xpose.msra.mxu0 0.0
      %1446 = vmatprep.subr.mxu0 0.0
      %1447 = vmatpush1.xpose.msra.mxu0 0.0
      %1448 = vmatprep.subr.mxu0 0.0
      %1449 = vmatpush1.xpose.msra.mxu0 0.0
      %1450 = vmatprep.subr.mxu0 0.0
      %1451 = vmatpush1.xpose.msra.mxu0 0.0
      %1452 = vmatprep.subr.mxu0 0.0
      %1453 = vmatpush1.xpose.msra.mxu0 0.0
      %1454 = vmatprep.subr.mxu0 0.0
      %1455 = vmatpush1.xpose.msra.mxu0 0.0
      %1456 = vmatprep.subr.mxu0 0.0
      %1457 = vmatpush1.xpose.msra.mxu0 0.0
      %1458 = vmatprep.subr.mxu0 0.0
      %1459 = vmatpush1.xpose.msra.mxu0 0.0
      %1460 = vmatprep.subr.mxu0 0.0
      %1461 = vmatpush1.xpose.msra.mxu0 0.0
      %1462 = vmatprep.subr.mxu0 0.0
      %1463 = vmatpush1.xpose.msra.mxu0 0.0
      %1464 = vmatprep.subr.mxu0 0.0
      %1465 = vmatpush1.xpose.msra.mxu0 0.0
      %1466 = vmatprep.subr.mxu0 0.0
      %1467 = vmatpush1.xpose.msra.mxu0 0.0
      %1468 = vmatprep.subr.mxu0 0.0
      %1469 = vmatpush1.xpose.msra.mxu0 0.0
      %1470 = vmatprep.subr.mxu0 0.0
      %1471 = vmatpush1.xpose.msra.mxu0 0.0
      %1472 = vmatprep.subr.mxu0 0.0
      %1473 = vmatpush1.xpose.msra.mxu0 0.0
      %1474 = vmatprep.subr.mxu0 0.0
      %1475 = vmatpush1.xpose.msra.mxu0 0.0
      %1476 = vmatprep.subr.mxu0 0.0
      %1477 = vmatpush1.xpose.msra.mxu0 0.0
      %1478 = vmatprep.subr.mxu0 0.0
      %1479 = vmatpush1.xpose.msra.mxu0 0.0
      %1480 = vmatprep.subr.mxu0 0.0
      %1481 = vmatpush1.xpose.msra.mxu0 0.0
      %1482 = vmatprep.subr.mxu0 0.0
      %1483 = vmatpush1.xpose.msra.mxu0 0.0
      %1484 = vmatprep.subr.mxu0 0.0
      %1485 = vmatpush1.xpose.msra.mxu0 0.0
      %1486 = vmatprep.subr.mxu0 0.0
      %1487 = vmatpush1.xpose.msra.mxu0 0.0
      %1488 = vmatprep.subr.mxu0 0.0
      %1489 = vmatpush1.xpose.msra.mxu0 0.0
      %1490 = vmatprep.subr.mxu0 0.0
      %1491 = vmatpush1.xpose.msra.mxu0 0.0
      %1492 = vmatprep.mubr.f32.mxu0 0.0
      %1493 = vmatmul.mubr.f32.gmra.mrb[0].mxu0 %v1426
      %v1494 = vpop.f32.mrb[0].mxu0
      %v1495 = vadd.f32 0.0, %v1494
      %v1496 = vpop.f32.mrb[0].mxu0
      %1497 = vdwg.mxu0
      %v1498 = vmul.f32 %v1495, 0.35355338
      %v1499 = vsel %vm664, %v1498, -inf
      %1500 = vmax.xlane.f32.xlu0 %v1499
      %v1501 = vpop.xlane.xlu0 %1500
      %v1502 = vsub.f32 %v1498, %v1501
      %v1503 = vmul.f32 %v1502, 1.442695
      %v1504 = vpow.pop %v1503
      %v1505 = vsel %vm664, %v1504, 0.0
      %1506 = vadd.xlane.f32.xlu0 %v1505
      %v1507 = vpop.xlane.xlu0 %1506
      %v1508 = vrcp.pop %v1507
      %v1509 = vmul.f32 %v752, %v1508
      %v1510 = vmul.f32 %v1504, %v1509
      %v1512 = vsel %vm664, %v1510, 0
      %1514 = vmatprep.subr.mxu0 0.0
      %1515 = vmatpush1.msra.mxu0 %v659
      %1516 = vmatprep.subr.mxu0 0.0
      %1517 = vmatpush1.msra.mxu0 0.0
      %1518 = vmatprep.subr.mxu0 0.0
      %1519 = vmatpush1.msra.mxu0 0.0
      %1520 = vmatprep.subr.mxu0 0.0
      %1521 = vmatpush1.msra.mxu0 0.0
      %1522 = vmatprep.subr.mxu0 0.0
      %1523 = vmatpush1.msra.mxu0 0.0
      %1524 = vmatprep.subr.mxu0 0.0
      %1525 = vmatpush1.msra.mxu0 0.0
      %1526 = vmatprep.subr.mxu0 0.0
      %1527 = vmatpush1.msra.mxu0 0.0
      %1528 = vmatprep.subr.mxu0 0.0
      %1529 = vmatpush1.msra.mxu0 0.0
      %1530 = vmatprep.subr.mxu0 0.0
      %1531 = vmatpush1.msra.mxu0 0.0
      %1532 = vmatprep.subr.mxu0 0.0
      %1533 = vmatpush1.msra.mxu0 0.0
      %1534 = vmatprep.subr.mxu0 0.0
      %1535 = vmatpush1.msra.mxu0 0.0
      %1536 = vmatprep.subr.mxu0 0.0
      %1537 = vmatpush1.msra.mxu0 0.0
      %1538 = vmatprep.subr.mxu0 0.0
      %1539 = vmatpush1.msra.mxu0 0.0
      %1540 = vmatprep.subr.mxu0 0.0
      %1541 = vmatpush1.msra.mxu0 0.0
      %1542 = vmatprep.subr.mxu0 0.0
      %1543 = vmatpush1.msra.mxu0 0.0
      %1544 = vmatprep.subr.mxu0 0.0
      %1545 = vmatpush1.msra.mxu0 0.0
      %1546 = vmatprep.subr.mxu0 0.0
      %1547 = vmatpush1.msra.mxu0 0.0
      %1548 = vmatprep.subr.mxu0 0.0
      %1549 = vmatpush1.msra.mxu0 0.0
      %1550 = vmatprep.subr.mxu0 0.0
      %1551 = vmatpush1.msra.mxu0 0.0
      %1552 = vmatprep.subr.mxu0 0.0
      %1553 = vmatpush1.msra.mxu0 0.0
      %1554 = vmatprep.subr.mxu0 0.0
      %1555 = vmatpush1.msra.mxu0 0.0
      %1556 = vmatprep.subr.mxu0 0.0
      %1557 = vmatpush1.msra.mxu0 0.0
      %1558 = vmatprep.subr.mxu0 0.0
      %1559 = vmatpush1.msra.mxu0 0.0
      %1560 = vmatprep.subr.mxu0 0.0
      %1561 = vmatpush1.msra.mxu0 0.0
      %1562 = vmatprep.subr.mxu0 0.0
      %1563 = vmatpush1.msra.mxu0 0.0
      %1564 = vmatprep.subr.mxu0 0.0
      %1565 = vmatpush1.msra.mxu0 0.0
      %1566 = vmatprep.subr.mxu0 0.0
      %1567 = vmatpush1.msra.mxu0 0.0
      %1568 = vmatprep.subr.mxu0 0.0
      %1569 = vmatpush1.msra.mxu0 0.0
      %1570 = vmatprep.subr.mxu0 0.0
      %1571 = vmatpush1.msra.mxu0 0.0
      %1572 = vmatprep.subr.mxu0 0.0
      %1573 = vmatpush1.msra.mxu0 0.0
      %1574 = vmatprep.subr.mxu0 0.0
      %1575 = vmatpush1.msra.mxu0 0.0
      %1576 = vmatprep.subr.mxu0 0.0
      %1577 = vmatpush1.msra.mxu0 0.0
      %1578 = vmatprep.mubr.f32.mxu0 0.0
      %1579 = vmatmul.mubr.f32.gmra.mrb[0].mxu0 %v1512
      %v1580 = vpop.f32.mrb[0].mxu0
      %v1581 = vadd.f32 0.0, %v1580
      %v1582 = vpop.f32.mrb[0].mxu0
      %1583 = vdwg.mxu0
      %1584 = vrot.lane.b32.xlu0 %v828, 104
      %v1585 = vpop.permute.xlu0 %1584
      %1586 = vrot.lane.b32.xlu0 %v829, 104
      %v1587 = vpop.permute.xlu0 %1586
      %1588 = vrot.lane.b32.xlu0 %v830, 104
      %v1589 = vpop.permute.xlu0 %1588
      %1590 = vrot.lane.b32.xlu0 %v831, 104
      %v1591 = vpop.permute.xlu0 %1590
      %v1593 = vsel %vm664, %v1581, 0
      %v1595 = vsel %vm664, %v1585, 0
      %v1597 = vsel %vm664, %v1587, 0
      %v1599 = vsel %vm664, %v1589, 0
      %v1601 = vsel %vm664, %v1591, 0
      %1603 = vmatprep.subr.mxu0 0.0
      %1604 = vmatpush1.xpose.msra.mxu0 %v1595
      %1605 = vmatprep.subr.mxu0 0.0
      %1606 = vmatpush1.xpose.msra.mxu0 %v1597
      %1607 = vmatprep.subr.mxu0 0.0
      %1608 = vmatpush1.xpose.msra.mxu0 %v1599
      %1609 = vmatprep.subr.mxu0 0.0
      %1610 = vmatpush1.xpose.msra.mxu0 %v1601
      %1611 = vmatprep.subr.mxu0 0.0
      %1612 = vmatpush1.xpose.msra.mxu0 0.0
      %1613 = vmatprep.subr.mxu0 0.0
      %1614 = vmatpush1.xpose.msra.mxu0 0.0
      %1615 = vmatprep.subr.mxu0 0.0
      %1616 = vmatpush1.xpose.msra.mxu0 0.0
      %1617 = vmatprep.subr.mxu0 0.0
      %1618 = vmatpush1.xpose.msra.mxu0 0.0
      %1619 = vmatprep.subr.mxu0 0.0
      %1620 = vmatpush1.xpose.msra.mxu0 0.0
      %1621 = vmatprep.subr.mxu0 0.0
      %1622 = vmatpush1.xpose.msra.mxu0 0.0
      %1623 = vmatprep.subr.mxu0 0.0
      %1624 = vmatpush1.xpose.msra.mxu0 0.0
      %1625 = vmatprep.subr.mxu0 0.0
      %1626 = vmatpush1.xpose.msra.mxu0 0.0
      %1627 = vmatprep.subr.mxu0 0.0
      %1628 = vmatpush1.xpose.msra.mxu0 0.0
      %1629 = vmatprep.subr.mxu0 0.0
      %1630 = vmatpush1.xpose.msra.mxu0 0.0
      %1631 = vmatprep.subr.mxu0 0.0
      %1632 = vmatpush1.xpose.msra.mxu0 0.0
      %1633 = vmatprep.subr.mxu0 0.0
      %1634 = vmatpush1.xpose.msra.mxu0 0.0
      %1635 = vmatprep.subr.mxu0 0.0
      %1636 = vmatpush1.xpose.msra.mxu0 0.0
      %1637 = vmatprep.subr.mxu0 0.0
      %1638 = vmatpush1.xpose.msra.mxu0 0.0
      %1639 = vmatprep.subr.mxu0 0.0
      %1640 = vmatpush1.xpose.msra.mxu0 0.0
      %1641 = vmatprep.subr.mxu0 0.0
      %1642 = vmatpush1.xpose.msra.mxu0 0.0
      %1643 = vmatprep.subr.mxu0 0.0
      %1644 = vmatpush1.xpose.msra.mxu0 0.0
      %1645 = vmatprep.subr.mxu0 0.0
      %1646 = vmatpush1.xpose.msra.mxu0 0.0
      %1647 = vmatprep.subr.mxu0 0.0
      %1648 = vmatpush1.xpose.msra.mxu0 0.0
      %1649 = vmatprep.subr.mxu0 0.0
      %1650 = vmatpush1.xpose.msra.mxu0 0.0
      %1651 = vmatprep.subr.mxu0 0.0
      %1652 = vmatpush1.xpose.msra.mxu0 0.0
      %1653 = vmatprep.subr.mxu0 0.0
      %1654 = vmatpush1.xpose.msra.mxu0 0.0
      %1655 = vmatprep.subr.mxu0 0.0
      %1656 = vmatpush1.xpose.msra.mxu0 0.0
      %1657 = vmatprep.subr.mxu0 0.0
      %1658 = vmatpush1.xpose.msra.mxu0 0.0
      %1659 = vmatprep.subr.mxu0 0.0
      %1660 = vmatpush1.xpose.msra.mxu0 0.0
      %1661 = vmatprep.subr.mxu0 0.0
      %1662 = vmatpush1.xpose.msra.mxu0 0.0
      %1663 = vmatprep.subr.mxu0 0.0
      %1664 = vmatpush1.xpose.msra.mxu0 0.0
      %1665 = vmatprep.subr.mxu0 0.0
      %1666 = vmatpush1.xpose.msra.mxu0 0.0
      %1667 = vmatprep.mubr.f32.mxu0 0.0
      %1668 = vmatmul.mubr.f32.gmra.mrb[0].mxu0 %v1593
      %v1669 = vpop.f32.mrb[0].mxu0
      %v1670 = vadd.f32 0.0, %v1669
      %v1671 = vpop.f32.mrb[0].mxu0
      %1672 = vdwg.mxu0
      %v1673 = vadd.f32 %v1422, %v1670
      %1674 = vst.msk [vmem:[%s355] sm:$0xff] %vm361, %v1673
      %p1675 = scmp.lt.s32.totalorder %s20, 1
      %s1676 = scalar_select %p1675, %s20, 1
      %s1677 = smul.addr %s1676, 8
      %s1678 = scalar_lea.vmem %s8, %s1677
      // Predicated region
      $region53: #{adapted_attention_forward.1} parent=51 // pred_check
        %p1679 = pneg %p226
      $region54: #{adapted_attention_forward.1} parent=51 // pred_check_branch
        %1681 = sbr.rel (%p1679) target = $region56
      $region55: #{adapted_attention_forward.1} parent=51 // pred_region
        _
      $region56: #{adapted_attention_forward.1} parent=51 // pred_fallthru
        _
    $region52: #{adapted_attention_forward.1} parent=5 // pred_fallthru
      _
    %p1682 = scmp.le.s32.totalorder 2, %s15
    // Predicated region
    $region57: #{adapted_attention_forward.1} parent=5 // pred_check
      %p1683 = pneg %p1682
    $region58: #{adapted_attention_forward.1} parent=5 // pred_check_branch
      %1685 = sbr.rel (%p1683) target = $region60
    $region59: #{adapted_attention_forward.1} parent=5 // pred_region
      %s1686 = ssub.s32 %s15, 2
      // Predicated region
      $region61: #{adapted_attention_forward.1} parent=59 // pred_check
        %p1687 = pneg %p232
      $region62: #{adapted_attention_forward.1} parent=59 // pred_check_branch
        %1689 = sbr.rel (%p1687) target = $region64
      $region63: #{adapted_attention_forward.1} parent=59 // pred_region
        %p1690 = scmp.lt.s32.totalorder %s21, 1
        %s1691 = scalar_select %p1690, %s21, 1
        %s1692 = smul.addr %s1691, 8
        %s1693 = scalar_lea.vmem %s8, %s1692
      $region64: #{adapted_attention_forward.1} parent=59 // pred_fallthru
        _
    $region60: #{adapted_attention_forward.1} parent=5 // pred_fallthru
      _
  $region6: #{adapted_attention_forward.1} parent=0 // loop_footer
    %s19 = sadd.s32 1, %s15
  $region7: #{adapted_attention_forward.1} parent=0 // loop_footer_branch
    %14 = sbr.rel target = $region3
  $region8: #{adapted_attention_forward.1} parent=0 // loop_exit
    _

</llo_original>
